<compile_context>
chip_gen: v7x
topology: tpu7x:2x2x1
jax: 0.10.0
libtpu: 0.0.40
codegen_flags: <defaults>
</compile_context>

<pallas_src>
import functools

import jax
import jax.numpy as jnp
from jax import lax
from jax.experimental import pallas as pl
from jax.experimental.pallas import tpu as pltpu


def _round_up(a, b):
    return ((a + b - 1) // b) * b


def _knn_kernel(x_ref, y_ref, dmin_ref, idx_ref, min_sc, arg_sc, *,
                cosine_dist, ny_total, ty):
    ky = pl.program_id(1)
    nky = pl.num_programs(1)

    # Init running min / argmin at the first y tile of each x tile.
    @pl.when(ky == 0)
    def _init():
        min_sc[...] = jnp.full(min_sc.shape, jnp.inf, dtype=jnp.float32)
        arg_sc[...] = jnp.zeros(arg_sc.shape, dtype=jnp.int32)

    x = x_ref[...].astype(jnp.float32)           # (tm, D)
    y = y_ref[...].astype(jnp.float32)           # (ty, D)

    # MXU: contract D on both sides; both operands stay in (rows, D) layout.
    # HIGHEST precision keeps the +/- cancellation of the matmul-form
    # euclidean distance close to exact torch.cdist numerics.
    xy = lax.dot_general(
        x, y, (((1,), (1,)), ((), ())),
        precision=lax.Precision.HIGHEST,
        preferred_element_type=jnp.float32)       # (tm, ty)

    if cosine_dist:
        # Post-matmul scaling: O(tm*ty) multiplies; rsqrt goes to the EUP.
        inv_xn = lax.rsqrt(jnp.sum(x * x, axis=1, keepdims=True))   # (tm, 1)
        inv_yn = lax.rsqrt(jnp.sum(y * y, axis=1))                  # (ty,)
        score = xy * inv_xn * inv_yn[None, :]     # cosine *similarity* (torch hack)
    else:
        xn2 = jnp.sum(x * x, axis=1, keepdims=True)                 # (tm, 1)
        yn2 = jnp.sum(y * y, axis=1)                                # (ty,)
        # Squared distance; min/argmin on squares (sqrt is monotonic), sqrt
        # only on the per-row winners at finalize.
        score = jnp.maximum(xn2 + yn2[None, :] - 2.0 * xy, 0.0)

    # Global column index of each entry of this y tile; mask y padding
    # (also kills NaNs from rsqrt(0) on zero-padded cosine rows).
    col = lax.broadcasted_iota(jnp.int32, score.shape, 1) + ky * ty
    score = jnp.where(col < ny_total, score, jnp.inf)

    row_min = jnp.min(score, axis=1)                                # (tm,)
    big = jnp.int32(2**31 - 1)
    # First index attaining the row minimum (torch.min argmin semantics).
    row_arg = jnp.min(jnp.where(score == row_min[:, None], col, big), axis=1)

    cur_min = min_sc[0, :]
    cur_arg = arg_sc[0, :]
    better = row_min < cur_min        # strict < keeps earlier (first) index on ties
    min_sc[0, :] = jnp.where(better, row_min, cur_min)
    arg_sc[0, :] = jnp.where(better, row_arg, cur_arg)

    @pl.when(ky == nky - 1)
    def _finalize():
        if cosine_dist:
            dmin_ref[0, :] = min_sc[0, :]
        else:
            dmin_ref[0, :] = jnp.sqrt(min_sc[0, :])   # sqrt only on (tm,) winners
        idx_ref[0, :] = arg_sc[0, :]


def _pairwise_min_dist(xf, yf, *, cosine_dist, tile_m=128, tile_y=256):
    """Row-wise (min distance, argmin index) of the x-vs-y distance matrix."""
    xf = xf.astype(jnp.float32)
    yf = yf.astype(jnp.float32)
    nx, d = xf.shape
    ny = yf.shape[0]

    # Tiles: multiples of 8 sublanes, capped to the rounded-up batch so tiny
    # batches don't inflate the padded grid.  Realistic batches get
    # MXU-friendly 128 x 256 tiles on all generations.
    tm = min(tile_m, _round_up(nx, 8))
    ty = min(tile_y, _round_up(ny, 8))

    nx_pad = _round_up(nx, tm)
    ny_pad = _round_up(ny, ty)
    if nx_pad != nx:
        xf = jnp.pad(xf, ((0, nx_pad - nx), (0, 0)))
    if ny_pad != ny:
        yf = jnp.pad(yf, ((0, ny_pad - ny), (0, 0)))

    gm = nx_pad // tm
    gy = ny_pad // ty

    kernel = functools.partial(
        _knn_kernel, cosine_dist=cosine_dist, ny_total=ny, ty=ty)

    itemsize = 4
    cost = pl.CostEstimate(
        flops=int(2.0 * nx_pad * ny_pad * d),
        transcendentals=int(nx_pad + ny_pad),
        bytes_accessed=int((gy * nx_pad + gm * ny_pad) * d * itemsize
                           + nx_pad * 2 * itemsize),
    )

    dmin, idx = pl.pallas_call(
        kernel,
        grid=(gm, gy),
        in_specs=[
            pl.BlockSpec((tm, d), lambda i, j: (i, 0)),   # x tile
            pl.BlockSpec((ty, d), lambda i, j: (j, 0)),   # y tile (reduction axis)
        ],
        out_specs=[
            pl.BlockSpec((1, tm), lambda i, j: (0, i)),   # lane-dense outputs
            pl.BlockSpec((1, tm), lambda i, j: (0, i)),
        ],
        out_shape=[
            jax.ShapeDtypeStruct((1, nx_pad), jnp.float32),
            jax.ShapeDtypeStruct((1, nx_pad), jnp.int32),
        ],
        scratch_shapes=[
            pltpu.VMEM((1, tm), jnp.float32),   # running min
            pltpu.VMEM((1, tm), jnp.int32),     # running argmin
        ],
        compiler_params=pltpu.CompilerParams(
            dimension_semantics=("parallel", "arbitrary"),
            vmem_limit_bytes=32 * 1024 * 1024,
        ),
        cost_estimate=cost,
    )(xf, yf)

    return dmin[0, :nx], idx[0, :nx]


class KNNComputerNoCheck:
    """JAX/Pallas port of the PyTorch KNNComputerNoCheck (K == 1 path)."""

    def __init__(self, sample_num, K=1, cosine_dist=False):
        # TODO(synk): K > 1 path needs a data-dependent per-row sort + scan
        # over zero-distance entries; not implemented as a Pallas kernel here.
        assert K == 1, "only K == 1 is implemented"
        self.K = K
        self.cosine_dist = cosine_dist
        # Deterministic "buffers", mirroring register_buffer in __init__.
        self.num_computed = jnp.zeros([], jnp.float32)
        self.min_dists = jnp.full((sample_num,), jnp.inf, dtype=jnp.float32)
        # torch uses int64; int32 here for TPU friendliness.
        self.nn_indices = jnp.zeros((sample_num,), dtype=jnp.int32)

    def forward(self, x, x_idx_start, y, y_idx_start):
        x_bsize, y_bsize = x.shape[0], y.shape[0]
        xf = x.reshape(x_bsize, -1)
        yf = y.reshape(y_bsize, -1)

        new_min, nn_idx = _pairwise_min_dist(xf, yf, cosine_dist=self.cosine_dist)

        old = lax.dynamic_slice(self.min_dists, (x_idx_start,), (x_bsize,))
        self.min_dists = lax.dynamic_update_slice(
            self.min_dists, jnp.minimum(new_min, old), (x_idx_start,))
        # Matches torch: indices unconditionally overwritten for this slice.
        self.nn_indices = lax.dynamic_update_slice(
            self.nn_indices, nn_idx + jnp.int32(y_idx_start), (x_idx_start,))

    def get_mean_nn_dist(self, sidx, eidx):
        if self.K == 1:
            return jnp.mean(self.min_dists[sidx:eidx])


def _reference(x, y, cosine_dist):
    """Pure-JAX reference (exact torch semantics) of the distance + min/argmin."""
    xf = x.reshape(x.shape[0], -1).astype(jnp.float32)
    yf = y.reshape(y.shape[0], -1).astype(jnp.float32)
    if cosine_dist:
        xf = xf / jnp.linalg.norm(xf, axis=1, keepdims=True)
        yf = yf / jnp.linalg.norm(yf, axis=1, keepdims=True)
        dist = jnp.dot(xf, yf.T, precision=lax.Precision.HIGHEST)
    else:
        diff = xf[:, None, :] - yf[None, :, :]
        dist = jnp.sqrt(jnp.sum(diff * diff, axis=-1))
    return jnp.min(dist, axis=1), jnp.argmin(dist, axis=1).astype(jnp.int32)


if __name__ == "__main__":
    key = jax.random.PRNGKey(0)
    k1, k2, k3, k4 = jax.random.split(key, 4)

    sample_num = 32

    # --- Test 1: euclidean distance, NCHW inputs -----------------------------
    x = jax.random.normal(k1, (8, 4, 16, 16), dtype=jnp.float32)
    y = jax.random.normal(k2, (8, 4, 16, 16), dtype=jnp.float32)
    x_idx_start, y_idx_start = 8, 4

    knn = KNNComputerNoCheck(sample_num, K=1, cosine_dist=False)
    knn.forward(x, x_idx_start, y, y_idx_start)
    jax.block_until_ready(knn.min_dists)
    jax.block_until_ready(knn.nn_indices)

    ref_min, ref_idx = _reference(x, y, cosine_dist=False)
    got_min = knn.min_dists[x_idx_start:x_idx_start + x.shape[0]]
    got_idx = knn.nn_indices[x_idx_start:x_idx_start + x.shape[0]]
    assert jnp.allclose(got_min, ref_min, rtol=1e-4, atol=1e-3), (got_min, ref_min)
    assert jnp.all(got_idx == ref_idx + y_idx_start), (got_idx, ref_idx)

    # --- Test 2: cosine path + ragged batch sizes (padding / masking) --------
    x2 = jax.random.normal(k3, (6, 4, 16, 16), dtype=jnp.float32)
    y2 = jax.random.normal(k4, (10, 4, 16, 16), dtype=jnp.float32)
    x_idx_start2, y_idx_start2 = 2, 7

    knn2 = KNNComputerNoCheck(sample_num, K=1, cosine_dist=True)
    knn2.forward(x2, x_idx_start2, y2, y_idx_start2)
    jax.block_until_ready(knn2.min_dists)
    jax.block_until_ready(knn2.nn_indices)

    ref_min2, ref_idx2 = _reference(x2, y2, cosine_dist=True)
    got_min2 = knn2.min_dists[x_idx_start2:x_idx_start2 + x2.shape[0]]
    got_idx2 = knn2.nn_indices[x_idx_start2:x_idx_start2 + x2.shape[0]]
    assert jnp.allclose(got_min2, ref_min2, rtol=1e-4, atol=1e-4), (got_min2, ref_min2)
    assert jnp.all(got_idx2 == ref_idx2 + y_idx_start2), (got_idx2, ref_idx2)

    print("KERNEL_OK")
</pallas_src>

<mosaic_0001>
module attributes {stable_mosaic.version = 11 : i64} {
  func.func @_knn_kernel(%arg0: i32, %arg1: i32, %arg2: memref<8x1024xf32, #tpu.memory_space<vmem>>, %arg3: memref<8x1024xf32, #tpu.memory_space<vmem>>, %arg4: memref<1x8xf32, #tpu.memory_space<vmem>>, %arg5: memref<1x8xi32, #tpu.memory_space<vmem>>, %arg6: memref<1x8xf32, #tpu.memory_space<vmem>>, %arg7: memref<1x8xi32, #tpu.memory_space<vmem>>) attributes {dimension_semantics = [#tpu.dimension_semantics<parallel>, #tpu.dimension_semantics<arbitrary>], iteration_bounds = array<i64: 1, 1>, scalar_prefetch = 0 : i64, scratch_operands = 2 : i64, tpu.core_type = #tpu.core_type<tc>, window_params = [{transform_indices = @transform_0, window_bounds = array<i64: 8, 1024>}, {transform_indices = @transform_1, window_bounds = array<i64: 8, 1024>}, {transform_indices = @transform_2, window_bounds = array<i64: 1, 8>}, {transform_indices = @transform_3, window_bounds = array<i64: 1, 8>}]} {
    %c0_i32 = arith.constant 0 : i32
    %0 = arith.cmpi eq, %arg1, %c0_i32 : i32
    %1 = arith.extui %0 : i1 to i32
    %c0_i32_0 = arith.constant 0 : i32
    %2 = arith.cmpi ne, %1, %c0_i32_0 : i32
    scf.if %2 {
      %cst_22 = arith.constant 0x7F800000 : f32
      %51 = vector.broadcast %cst_22 : f32 to vector<1x8xf32>
      %c0_23 = arith.constant 0 : index
      %c0_24 = arith.constant 0 : index
      %52 = vector.load %arg6[%c0_23, %c0_24] : memref<1x8xf32, #tpu.memory_space<vmem>>, vector<1x8xf32>
      tpu.vector_store %arg6[%c0_23, %c0_24], %51 {strides = array<i32>} : memref<1x8xf32, #tpu.memory_space<vmem>>, vector<1x8xf32>,
      %c0_i32_25 = arith.constant 0 : i32
      %53 = vector.broadcast %c0_i32_25 : i32 to vector<1x8xi32>
      %c0_26 = arith.constant 0 : index
      %c0_27 = arith.constant 0 : index
      %54 = vector.load %arg7[%c0_26, %c0_27] : memref<1x8xi32, #tpu.memory_space<vmem>>, vector<1x8xi32>
      tpu.vector_store %arg7[%c0_26, %c0_27], %53 {strides = array<i32>} : memref<1x8xi32, #tpu.memory_space<vmem>>, vector<1x8xi32>,
    } else {
    }
    %c0 = arith.constant 0 : index
    %c0_1 = arith.constant 0 : index
    %3 = vector.load %arg2[%c0, %c0_1] : memref<8x1024xf32, #tpu.memory_space<vmem>>, vector<8x1024xf32>
    %c0_2 = arith.constant 0 : index
    %c0_3 = arith.constant 0 : index
    %4 = vector.load %arg3[%c0_2, %c0_3] : memref<8x1024xf32, #tpu.memory_space<vmem>>, vector<8x1024xf32>
    %cst = arith.constant dense<0.000000e+00> : vector<8x8xf32>
    %5 = tpu.matmul %3, %4, %cst {dimension_numbers = #tpu.dot_dimension_numbers<[1], [1], [0], [0], [0, 0, 1, 0], [], []>, precision = #tpu.contract_precision<fp32>} : vector<8x1024xf32>, vector<8x1024xf32>, vector<8x8xf32> -> vector<8x8xf32>
    %6 = arith.mulf %3, %3 : vector<8x1024xf32>
    %cst_4 = arith.constant dense<0.000000e+00> : vector<8xf32>
    %7 = vector.multi_reduction <add>, %6, %cst_4 [1] : vector<8x1024xf32> to vector<8xf32>
    %8 = vector.shape_cast %7 : vector<8xf32> to vector<8x1xf32>
    %9 = arith.mulf %4, %4 : vector<8x1024xf32>
    %cst_5 = arith.constant dense<0.000000e+00> : vector<8xf32>
    %10 = vector.multi_reduction <add>, %9, %cst_5 [1] : vector<8x1024xf32> to vector<8xf32>
    %11 = vector.shape_cast %10 : vector<8xf32> to vector<1x8xf32>
    %12 = vector.broadcast %8 : vector<8x1xf32> to vector<8x8xf32>
    %13 = vector.broadcast %11 : vector<1x8xf32> to vector<8x8xf32>
    %14 = arith.addf %12, %13 : vector<8x8xf32>
    %cst_6 = arith.constant 2.000000e+00 : f32
    %15 = vector.broadcast %cst_6 : f32 to vector<8x8xf32>
    %16 = arith.mulf %15, %5 : vector<8x8xf32>
    %17 = arith.subf %14, %16 : vector<8x8xf32>
    %cst_7 = arith.constant 0.000000e+00 : f32
    %18 = vector.broadcast %cst_7 : f32 to vector<8x8xf32>
    %19 = arith.maximumf %17, %18 : vector<8x8xf32>
    %20 = tpu.iota {dimensions = array<i32: 1>} : vector<8x8xi32>
    %c8_i32 = arith.constant 8 : i32
    %21 = arith.muli %arg1, %c8_i32 : i32
    %22 = vector.broadcast %21 : i32 to vector<8x8xi32>
    %23 = arith.addi %20, %22 : vector<8x8xi32>
    %c8_i32_8 = arith.constant 8 : i32
    %24 = vector.broadcast %c8_i32_8 : i32 to vector<8x8xi32>
    %25 = arith.cmpi slt, %23, %24 : vector<8x8xi32>
    %cst_9 = arith.constant 0x7F800000 : f32
    %26 = vector.broadcast %cst_9 : f32 to vector<8x8xf32>
    %27 = arith.select %25, %19, %26 : vector<8x8xi1>, vector<8x8xf32>
    %cst_10 = arith.constant dense<0x7F800000> : vector<8xf32>
    %28 = vector.multi_reduction <minimumf>, %27, %cst_10 [1] : vector<8x8xf32> to vector<8xf32>
    %29 = vector.shape_cast %28 : vector<8xf32> to vector<8x1xf32>
    %30 = vector.broadcast %29 : vector<8x1xf32> to vector<8x8xf32>
    %31 = arith.cmpf oeq, %27, %30 : vector<8x8xf32>
    %c2147483647_i32 = arith.constant 2147483647 : i32
    %32 = vector.broadcast %c2147483647_i32 : i32 to vector<8x8xi32>
    %33 = arith.select %31, %23, %32 : vector<8x8xi1>, vector<8x8xi32>
    %cst_11 = arith.constant dense<2147483647> : vector<8xi32>
    %34 = vector.multi_reduction <minsi>, %33, %cst_11 [1] : vector<8x8xi32> to vector<8xi32>
    %c0_12 = arith.constant 0 : index
    %c0_13 = arith.constant 0 : index
    %35 = vector.load %arg6[%c0_12, %c0_13] : memref<1x8xf32, #tpu.memory_space<vmem>>, vector<1x8xf32>
    %36 = vector.shape_cast %35 : vector<1x8xf32> to vector<8xf32>
    %c0_14 = arith.constant 0 : index
    %c0_15 = arith.constant 0 : index
    %37 = vector.load %arg7[%c0_14, %c0_15] : memref<1x8xi32, #tpu.memory_space<vmem>>, vector<1x8xi32>
    %38 = vector.shape_cast %37 : vector<1x8xi32> to vector<8xi32>
    %39 = arith.cmpf olt, %28, %36 : vector<8xf32>
    %40 = arith.select %39, %28, %36 : vector<8xi1>, vector<8xf32>
    %c0_16 = arith.constant 0 : index
    %c0_17 = arith.constant 0 : index
    %41 = vector.load %arg6[%c0_16, %c0_17] : memref<1x8xf32, #tpu.memory_space<vmem>>, vector<1x8xf32>
    %42 = vector.shape_cast %41 : vector<1x8xf32> to vector<8xf32>
    %43 = vector.shape_cast %40 : vector<8xf32> to vector<1x8xf32>
    tpu.vector_store %arg6[%c0_16, %c0_17], %43 {strides = array<i32>} : memref<1x8xf32, #tpu.memory_space<vmem>>, vector<1x8xf32>,
    %44 = arith.select %39, %34, %38 : vector<8xi1>, vector<8xi32>
    %c0_18 = arith.constant 0 : index
    %c0_19 = arith.constant 0 : index
    %45 = vector.load %arg7[%c0_18, %c0_19] : memref<1x8xi32, #tpu.memory_space<vmem>>, vector<1x8xi32>
    %46 = vector.shape_cast %45 : vector<1x8xi32> to vector<8xi32>
    %47 = vector.shape_cast %44 : vector<8xi32> to vector<1x8xi32>
    tpu.vector_store %arg7[%c0_18, %c0_19], %47 {strides = array<i32>} : memref<1x8xi32, #tpu.memory_space<vmem>>, vector<1x8xi32>,
    %c0_i32_20 = arith.constant 0 : i32
    %48 = arith.cmpi eq, %arg1, %c0_i32_20 : i32
    %49 = arith.extui %48 : i1 to i32
    %c0_i32_21 = arith.constant 0 : i32
    %50 = arith.cmpi ne, %49, %c0_i32_21 : i32
    scf.if %50 {
      %c0_22 = arith.constant 0 : index
      %c0_23 = arith.constant 0 : index
      %51 = vector.load %arg6[%c0_22, %c0_23] : memref<1x8xf32, #tpu.memory_space<vmem>>, vector<1x8xf32>
      %52 = vector.shape_cast %51 : vector<1x8xf32> to vector<8xf32>
      %53 = math.sqrt %52 : vector<8xf32>
      %c0_24 = arith.constant 0 : index
      %c0_25 = arith.constant 0 : index
      %54 = vector.load %arg4[%c0_24, %c0_25] : memref<1x8xf32, #tpu.memory_space<vmem>>, vector<1x8xf32>
      %55 = vector.shape_cast %54 : vector<1x8xf32> to vector<8xf32>
      %56 = vector.shape_cast %53 : vector<8xf32> to vector<1x8xf32>
      tpu.vector_store %arg4[%c0_24, %c0_25], %56 {strides = array<i32>} : memref<1x8xf32, #tpu.memory_space<vmem>>, vector<1x8xf32>,
      %c0_26 = arith.constant 0 : index
      %c0_27 = arith.constant 0 : index
      %57 = vector.load %arg7[%c0_26, %c0_27] : memref<1x8xi32, #tpu.memory_space<vmem>>, vector<1x8xi32>
      %58 = vector.shape_cast %57 : vector<1x8xi32> to vector<8xi32>
      %c0_28 = arith.constant 0 : index
      %c0_29 = arith.constant 0 : index
      %59 = vector.load %arg5[%c0_28, %c0_29] : memref<1x8xi32, #tpu.memory_space<vmem>>, vector<1x8xi32>
      %60 = vector.shape_cast %59 : vector<1x8xi32> to vector<8xi32>
      %61 = vector.shape_cast %58 : vector<8xi32> to vector<1x8xi32>
      tpu.vector_store %arg5[%c0_28, %c0_29], %61 {strides = array<i32>} : memref<1x8xi32, #tpu.memory_space<vmem>>, vector<1x8xi32>,
    } else {
    }
    return
  }
  func.func @transform_0(%arg0: i32, %arg1: i32) -> (i32, i32) {
    %c0_i32 = arith.constant 0 : i32
    %c0_i32_0 = arith.constant 0 : i32
    return %arg0, %c0_i32 : i32, i32
  }
  func.func @transform_1(%arg0: i32, %arg1: i32) -> (i32, i32) {
    %c0_i32 = arith.constant 0 : i32
    %c0_i32_0 = arith.constant 0 : i32
    return %arg1, %c0_i32 : i32, i32
  }
  func.func @transform_2(%arg0: i32, %arg1: i32) -> (i32, i32) {
    %c0_i32 = arith.constant 0 : i32
    %c0_i32_0 = arith.constant 0 : i32
    return %c0_i32, %arg0 : i32, i32
  }
  func.func @transform_3(%arg0: i32, %arg1: i32) -> (i32, i32) {
    %c0_i32 = arith.constant 0 : i32
    %c0_i32_0 = arith.constant 0 : i32
    return %c0_i32, %arg0 : i32, i32
  }
}

</mosaic_0001>

<llo_original>
// kernel: tpu_custom_call.1
$region0: #{tpu_custom_call.1}
  #allocation0 [shape = 'u32[]', space=smem, size = 0x4, offset = 0x4, fixed_abs, tag = 'smem constant byte address 0x4 - core index']
  #allocation1 [shape = 'u32[144,128]{1,0:T(1,128)}', space=vmem, size = 0x12000, scoped, tag = 'internal scratch']
  #allocation2 [shape = 'f32[1,8]{1,0:T(1,128)}', space=vmem, size = 0x200, scoped, tag = 'scratch operand']
  #allocation3 [shape = 's32[1,8]{1,0:T(1,128)}', space=vmem, size = 0x200, scoped, tag = 'scratch operand']
  %s0 = inlined_call_operand.hbm [shape: f32[8,1024], index: 0, kind: input, shape index: {}]
  %s1 = inlined_call_operand.hbm [shape: f32[8,1024], index: 1, kind: input, shape index: {}]
  %s2 = inlined_call_operand.hbm [shape: f32[1,8], index: 2, kind: output, shape index: {0}]
  %s3 = inlined_call_operand.hbm [shape: s32[1,8], index: 3, kind: output, shape index: {1}]
  %4 = xla_tuple %s2, %s3
  %s5 = sld [smem:[#allocation0]]
  $region42: #{tpu_custom_call.1} parent=0
    _
  %s7 = ssub.s32 1, %s5
  %s8 = scalar_select 0, %s7, %s5
  $region1: #{tpu_custom_call.1} parent=0
    #allocation4 [shape = 'u8[32768]{0}', space=vmem, size = 0x8000, scoped, tag = 'input window, operand 0, single buffered']
    #allocation5 [shape = 's32[1]{0}', space=sflag, size = 0x4, scoped, tag = 'scoped memory for tpu_custom_call.1']
    #allocation6 [shape = 's32[1]{0}', space=sflag, size = 0x4, scoped, tag = 'scoped memory for tpu_custom_call.1']
    #allocation7 [shape = 'u8[32768]{0}', space=vmem, size = 0x8000, scoped, tag = 'input window, operand 1, single buffered']
    #allocation8 [shape = 's32[1]{0}', space=sflag, size = 0x4, scoped, tag = 'scoped memory for tpu_custom_call.1']
    #allocation9 [shape = 'u8[512]{0}', space=vmem, size = 0x400, scoped, tag = 'output window, operand 0, single buffered']
    #allocation10 [shape = 'u8[512]{0}', space=vmem, size = 0x400, scoped, tag = 'output window, operand 1, single buffered']
    #allocation11 [shape = 's32[1]{0}', space=sflag, size = 0x4, scoped, tag = 'scoped memory for tpu_custom_call.1']
    %9 = vsyncpa [#allocation5], 0
    %10 = vsyncpa [#allocation8], 0
    %11 = vsyncpa [#allocation6], 0
    %12 = vsyncpa [#allocation11], 0
    // Predicated region
    $region2: #{tpu_custom_call.1} parent=1 // pred_check
      _
    $region3: #{tpu_custom_call.1} parent=1 // pred_check_branch
      %14 = sbr.rel (0) target = $region5
    $region4: #{tpu_custom_call.1} parent=1 // pred_region
      %s16 = ssub.s32 1024, 1024
      %17 = vsyncadd [#allocation5], %s16
      %s19 = sshll.u32 [#allocation4], 4
      %s20 = int_to_ptr.vmem [resolvable:$true] %s19
      %22 = dma.hbm_to_vmem [thread:$0]  %s0, 1024, %s20, [#allocation5]
    $region5: #{tpu_custom_call.1} parent=1 // pred_fallthru
      _
    // Predicated region
    $region6: #{tpu_custom_call.1} parent=1 // pred_check
      _
    $region7: #{tpu_custom_call.1} parent=1 // pred_check_branch
      %24 = sbr.rel (0) target = $region9
    $region8: #{tpu_custom_call.1} parent=1 // pred_region
      %s26 = ssub.s32 1024, 1024
      %27 = vsyncadd [#allocation8], %s26
      %s29 = sshll.u32 [#allocation7], 4
      %s30 = int_to_ptr.vmem [resolvable:$true] %s29
      %32 = dma.hbm_to_vmem [thread:$0]  %s1, 1024, %s30, [#allocation8]
    $region9: #{tpu_custom_call.1} parent=1 // pred_fallthru
      _
    // Predicated region
    $region10: #{tpu_custom_call.1} parent=1 // pred_check
      _
    $region11: #{tpu_custom_call.1} parent=1 // pred_check_branch
      %34 = sbr.rel (0) target = $region13
    $region12: #{tpu_custom_call.1} parent=1 // pred_region
      %35 = dma.done [#allocation5], 1024
    $region13: #{tpu_custom_call.1} parent=1 // pred_fallthru
      _
    // Predicated region
    $region14: #{tpu_custom_call.1} parent=1 // pred_check
      _
    $region15: #{tpu_custom_call.1} parent=1 // pred_check_branch
      %37 = sbr.rel (0) target = $region17
    $region16: #{tpu_custom_call.1} parent=1 // pred_region
      %38 = dma.done [#allocation8], 1024
    $region17: #{tpu_custom_call.1} parent=1 // pred_fallthru
      _
    %p39 = scmp.eq.s32.totalorder 0, 0
    // Predicated region
    $region18: #{tpu_custom_call.1} parent=1 // pred_check
      %p40 = pneg %p39
    $region19: #{tpu_custom_call.1} parent=1 // pred_check_branch
      %42 = sbr.rel (%p40) target = $region21
    $region20: #{tpu_custom_call.1} parent=1 // pred_region
      %vm43 = vcmask 57344
      %44 = vst.msk [vmem:[#allocation2] sm:$0x1] %vm43, inf
      %45 = vst.msk [vmem:[#allocation3] sm:$0x1] %vm43, 0
    $region21: #{tpu_custom_call.1} parent=1 // pred_fallthru
      _
    %v46 = vld [vmem:[#allocation4] sm:$0xff]
    %v47 = vld [vmem:[#allocation4 + $0x8] sm:$0xff]
    %v48 = vld [vmem:[#allocation4 + $0x10] sm:$0xff]
    %v49 = vld [vmem:[#allocation4 + $0x18] sm:$0xff]
    %v50 = vld [vmem:[#allocation4 + $0x20] sm:$0xff]
    %v51 = vld [vmem:[#allocation4 + $0x28] sm:$0xff]
    %v52 = vld [vmem:[#allocation4 + $0x30] sm:$0xff]
    %v53 = vld [vmem:[#allocation4 + $0x38] sm:$0xff]
    %v54 = vld [vmem:[#allocation7] sm:$0xff]
    %v55 = vld [vmem:[#allocation7 + $0x8] sm:$0xff]
    %v56 = vld [vmem:[#allocation7 + $0x10] sm:$0xff]
    %v57 = vld [vmem:[#allocation7 + $0x18] sm:$0xff]
    %v58 = vld [vmem:[#allocation7 + $0x20] sm:$0xff]
    %v59 = vld [vmem:[#allocation7 + $0x28] sm:$0xff]
    %v60 = vld [vmem:[#allocation7 + $0x30] sm:$0xff]
    %v61 = vld [vmem:[#allocation7 + $0x38] sm:$0xff]
    %v62 = vand.u32 %v55, 4294901760
    %63 = vmatprep.subr.mxu0 %v62
    %v64 = vand.u32 %v54, 4294901760
    %65 = vmatpush1.xpose.msra.mxu0 %v64
    %66 = vmatprep.subr.mxu0 0.0
    %67 = vmatpush1.xpose.msra.mxu0 0.0
    %68 = vmatprep.subr.mxu0 0.0
    %69 = vmatpush1.xpose.msra.mxu0 0.0
    %70 = vmatprep.subr.mxu0 0.0
    %71 = vmatpush1.xpose.msra.mxu0 0.0
    %72 = vmatprep.subr.mxu0 0.0
    %73 = vmatpush1.xpose.msra.mxu0 0.0
    %74 = vmatprep.subr.mxu0 0.0
    %75 = vmatpush1.xpose.msra.mxu0 0.0
    %76 = vmatprep.subr.mxu0 0.0
    %77 = vmatpush1.xpose.msra.mxu0 0.0
    %78 = vmatprep.subr.mxu0 0.0
    %79 = vmatpush1.xpose.msra.mxu0 0.0
    %80 = vmatprep.subr.mxu0 0.0
    %81 = vmatpush1.xpose.msra.mxu0 0.0
    %82 = vmatprep.subr.mxu0 0.0
    %83 = vmatpush1.xpose.msra.mxu0 0.0
    %84 = vmatprep.subr.mxu0 0.0
    %85 = vmatpush1.xpose.msra.mxu0 0.0
    %86 = vmatprep.subr.mxu0 0.0
    %87 = vmatpush1.xpose.msra.mxu0 0.0
    %88 = vmatprep.subr.mxu0 0.0
    %89 = vmatpush1.xpose.msra.mxu0 0.0
    %90 = vmatprep.subr.mxu0 0.0
    %91 = vmatpush1.xpose.msra.mxu0 0.0
    %92 = vmatprep.subr.mxu0 0.0
    %93 = vmatpush1.xpose.msra.mxu0 0.0
    %94 = vmatprep.subr.mxu0 0.0
    %95 = vmatpush1.xpose.msra.mxu0 0.0
    %96 = vmatprep.subr.mxu0 0.0
    %97 = vmatpush1.xpose.msra.mxu0 0.0
    %98 = vmatprep.subr.mxu0 0.0
    %99 = vmatpush1.xpose.msra.mxu0 0.0
    %100 = vmatprep.subr.mxu0 0.0
    %101 = vmatpush1.xpose.msra.mxu0 0.0
    %102 = vmatprep.subr.mxu0 0.0
    %103 = vmatpush1.xpose.msra.mxu0 0.0
    %104 = vmatprep.subr.mxu0 0.0
    %105 = vmatpush1.xpose.msra.mxu0 0.0
    %106 = vmatprep.subr.mxu0 0.0
    %107 = vmatpush1.xpose.msra.mxu0 0.0
    %108 = vmatprep.subr.mxu0 0.0
    %109 = vmatpush1.xpose.msra.mxu0 0.0
    %110 = vmatprep.subr.mxu0 0.0
    %111 = vmatpush1.xpose.msra.mxu0 0.0
    %112 = vmatprep.subr.mxu0 0.0
    %113 = vmatpush1.xpose.msra.mxu0 0.0
    %114 = vmatprep.subr.mxu0 0.0
    %115 = vmatpush1.xpose.msra.mxu0 0.0
    %116 = vmatprep.subr.mxu0 0.0
    %117 = vmatpush1.xpose.msra.mxu0 0.0
    %118 = vmatprep.subr.mxu0 0.0
    %119 = vmatpush1.xpose.msra.mxu0 0.0
    %120 = vmatprep.subr.mxu0 0.0
    %121 = vmatpush1.xpose.msra.mxu0 0.0
    %122 = vmatprep.subr.mxu0 0.0
    %123 = vmatpush1.xpose.msra.mxu0 0.0
    %124 = vmatprep.subr.mxu0 0.0
    %125 = vmatpush1.xpose.msra.mxu0 0.0
    %126 = vmatprep.subr.mxu0 0.0
    %127 = vmatpush1.xpose.msra.mxu0 0.0
    %v128 = vand.u32 %v47, 4294901760
    %v129 = vsub.f32 %v47, %v128
    %v130 = vand.u32 %v129, 4294901760
    %v131 = vsub.f32 %v129, %v130
    %v132 = vand.u32 %v131, 4294901760
    %133 = vmatprep.mubr.f32.mxu0 %v132
    %v134 = vand.u32 %v46, 4294901760
    %v135 = vsub.f32 %v46, %v134
    %v136 = vand.u32 %v135, 4294901760
    %v137 = vsub.f32 %v135, %v136
    %v138 = vand.u32 %v137, 4294901760
    %139 = vmatmul.mubr.f32.gmra.mrb[0].mxu0 %v138
    %v140 = vpop.f32.mrb[0].mxu0
    %v141 = vadd.f32 0.0, %v140
    %v142 = vpop.f32.mrb[0].mxu0
    %143 = vdwg.mxu0
    %v144 = vand.u32 %v55, 4294901760
    %v145 = vsub.f32 %v55, %v144
    %v146 = vand.u32 %v145, 4294901760
    %v147 = vsub.f32 %v145, %v146
    %v148 = vand.u32 %v147, 4294901760
    %149 = vmatprep.subr.mxu0 %v148
    %v150 = vand.u32 %v54, 4294901760
    %v151 = vsub.f32 %v54, %v150
    %v152 = vand.u32 %v151, 4294901760
    %v153 = vsub.f32 %v151, %v152
    %v154 = vand.u32 %v153, 4294901760
    %155 = vmatpush1.xpose.msra.mxu0 %v154
    %156 = vmatprep.subr.mxu0 0.0
    %157 = vmatpush1.xpose.msra.mxu0 0.0
    %158 = vmatprep.subr.mxu0 0.0
    %159 = vmatpush1.xpose.msra.mxu0 0.0
    %160 = vmatprep.subr.mxu0 0.0
    %161 = vmatpush1.xpose.msra.mxu0 0.0
    %162 = vmatprep.subr.mxu0 0.0
    %163 = vmatpush1.xpose.msra.mxu0 0.0
    %164 = vmatprep.subr.mxu0 0.0
    %165 = vmatpush1.xpose.msra.mxu0 0.0
    %166 = vmatprep.subr.mxu0 0.0
    %167 = vmatpush1.xpose.msra.mxu0 0.0
    %168 = vmatprep.subr.mxu0 0.0
    %169 = vmatpush1.xpose.msra.mxu0 0.0
    %170 = vmatprep.subr.mxu0 0.0
    %171 = vmatpush1.xpose.msra.mxu0 0.0
    %172 = vmatprep.subr.mxu0 0.0
    %173 = vmatpush1.xpose.msra.mxu0 0.0
    %174 = vmatprep.subr.mxu0 0.0
    %175 = vmatpush1.xpose.msra.mxu0 0.0
    %176 = vmatprep.subr.mxu0 0.0
    %177 = vmatpush1.xpose.msra.mxu0 0.0
    %178 = vmatprep.subr.mxu0 0.0
    %179 = vmatpush1.xpose.msra.mxu0 0.0
    %180 = vmatprep.subr.mxu0 0.0
    %181 = vmatpush1.xpose.msra.mxu0 0.0
    %182 = vmatprep.subr.mxu0 0.0
    %183 = vmatpush1.xpose.msra.mxu0 0.0
    %184 = vmatprep.subr.mxu0 0.0
    %185 = vmatpush1.xpose.msra.mxu0 0.0
    %186 = vmatprep.subr.mxu0 0.0
    %187 = vmatpush1.xpose.msra.mxu0 0.0
    %188 = vmatprep.subr.mxu0 0.0
    %189 = vmatpush1.xpose.msra.mxu0 0.0
    %190 = vmatprep.subr.mxu0 0.0
    %191 = vmatpush1.xpose.msra.mxu0 0.0
    %192 = vmatprep.subr.mxu0 0.0
    %193 = vmatpush1.xpose.msra.mxu0 0.0
    %194 = vmatprep.subr.mxu0 0.0
    %195 = vmatpush1.xpose.msra.mxu0 0.0
    %196 = vmatprep.subr.mxu0 0.0
    %197 = vmatpush1.xpose.msra.mxu0 0.0
    %198 = vmatprep.subr.mxu0 0.0
    %199 = vmatpush1.xpose.msra.mxu0 0.0
    %200 = vmatprep.subr.mxu0 0.0
    %201 = vmatpush1.xpose.msra.mxu0 0.0
    %202 = vmatprep.subr.mxu0 0.0
    %203 = vmatpush1.xpose.msra.mxu0 0.0
    %204 = vmatprep.subr.mxu0 0.0
    %205 = vmatpush1.xpose.msra.mxu0 0.0
    %206 = vmatprep.subr.mxu0 0.0
    %207 = vmatpush1.xpose.msra.mxu0 0.0
    %208 = vmatprep.subr.mxu0 0.0
    %209 = vmatpush1.xpose.msra.mxu0 0.0
    %210 = vmatprep.subr.mxu0 0.0
    %211 = vmatpush1.xpose.msra.mxu0 0.0
    %212 = vmatprep.subr.mxu0 0.0
    %213 = vmatpush1.xpose.msra.mxu0 0.0
    %214 = vmatprep.subr.mxu0 0.0
    %215 = vmatpush1.xpose.msra.mxu0 0.0
    %216 = vmatprep.subr.mxu0 0.0
    %217 = vmatpush1.xpose.msra.mxu0 0.0
    %v218 = vand.u32 %v47, 4294901760
    %219 = vmatprep.mubr.f32.mxu0 %v218
    %v220 = vand.u32 %v46, 4294901760
    %221 = vmatmul.mubr.f32.gmra.mrb[0].mxu0 %v220
    %v222 = vpop.f32.mrb[0].mxu0
    %v223 = vadd.f32 %v141, %v222
    %v224 = vpop.f32.mrb[0].mxu0
    %225 = vdwg.mxu0
    %v226 = vand.u32 %v55, 4294901760
    %v227 = vsub.f32 %v55, %v226
    %228 = vmatprep.subr.mxu0 %v227
    %v229 = vand.u32 %v54, 4294901760
    %v230 = vsub.f32 %v54, %v229
    %231 = vmatpush1.xpose.msra.mxu0 %v230
    %232 = vmatprep.subr.mxu0 0.0
    %233 = vmatpush1.xpose.msra.mxu0 0.0
    %234 = vmatprep.subr.mxu0 0.0
    %235 = vmatpush1.xpose.msra.mxu0 0.0
    %236 = vmatprep.subr.mxu0 0.0
    %237 = vmatpush1.xpose.msra.mxu0 0.0
    %238 = vmatprep.subr.mxu0 0.0
    %239 = vmatpush1.xpose.msra.mxu0 0.0
    %240 = vmatprep.subr.mxu0 0.0
    %241 = vmatpush1.xpose.msra.mxu0 0.0
    %242 = vmatprep.subr.mxu0 0.0
    %243 = vmatpush1.xpose.msra.mxu0 0.0
    %244 = vmatprep.subr.mxu0 0.0
    %245 = vmatpush1.xpose.msra.mxu0 0.0
    %246 = vmatprep.subr.mxu0 0.0
    %247 = vmatpush1.xpose.msra.mxu0 0.0
    %248 = vmatprep.subr.mxu0 0.0
    %249 = vmatpush1.xpose.msra.mxu0 0.0
    %250 = vmatprep.subr.mxu0 0.0
    %251 = vmatpush1.xpose.msra.mxu0 0.0
    %252 = vmatprep.subr.mxu0 0.0
    %253 = vmatpush1.xpose.msra.mxu0 0.0
    %254 = vmatprep.subr.mxu0 0.0
    %255 = vmatpush1.xpose.msra.mxu0 0.0
    %256 = vmatprep.subr.mxu0 0.0
    %257 = vmatpush1.xpose.msra.mxu0 0.0
    %258 = vmatprep.subr.mxu0 0.0
    %259 = vmatpush1.xpose.msra.mxu0 0.0
    %260 = vmatprep.subr.mxu0 0.0
    %261 = vmatpush1.xpose.msra.mxu0 0.0
    %262 = vmatprep.subr.mxu0 0.0
    %263 = vmatpush1.xpose.msra.mxu0 0.0
    %264 = vmatprep.subr.mxu0 0.0
    %265 = vmatpush1.xpose.msra.mxu0 0.0
    %266 = vmatprep.subr.mxu0 0.0
    %267 = vmatpush1.xpose.msra.mxu0 0.0
    %268 = vmatprep.subr.mxu0 0.0
    %269 = vmatpush1.xpose.msra.mxu0 0.0
    %270 = vmatprep.subr.mxu0 0.0
    %271 = vmatpush1.xpose.msra.mxu0 0.0
    %272 = vmatprep.subr.mxu0 0.0
    %273 = vmatpush1.xpose.msra.mxu0 0.0
    %274 = vmatprep.subr.mxu0 0.0
    %275 = vmatpush1.xpose.msra.mxu0 0.0
    %276 = vmatprep.subr.mxu0 0.0
    %277 = vmatpush1.xpose.msra.mxu0 0.0
    %278 = vmatprep.subr.mxu0 0.0
    %279 = vmatpush1.xpose.msra.mxu0 0.0
    %280 = vmatprep.subr.mxu0 0.0
    %281 = vmatpush1.xpose.msra.mxu0 0.0
    %282 = vmatprep.subr.mxu0 0.0
    %283 = vmatpush1.xpose.msra.mxu0 0.0
    %284 = vmatprep.subr.mxu0 0.0
    %285 = vmatpush1.xpose.msra.mxu0 0.0
    %286 = vmatprep.subr.mxu0 0.0
    %287 = vmatpush1.xpose.msra.mxu0 0.0
    %288 = vmatprep.subr.mxu0 0.0
    %289 = vmatpush1.xpose.msra.mxu0 0.0
    %290 = vmatprep.subr.mxu0 0.0
    %291 = vmatpush1.xpose.msra.mxu0 0.0
    %292 = vmatprep.subr.mxu0 0.0
    %293 = vmatpush1.xpose.msra.mxu0 0.0
    %v294 = vand.u32 %v47, 4294901760
    %v295 = vsub.f32 %v47, %v294
    %296 = vmatprep.mubr.f32.mxu0 %v295
    %v297 = vand.u32 %v46, 4294901760
    %v298 = vsub.f32 %v46, %v297
    %299 = vmatmul.mubr.f32.gmra.mrb[0].mxu0 %v298
    %v300 = vpop.f32.mrb[0].mxu0
    %v301 = vadd.f32 %v223, %v300
    %v302 = vpop.f32.mrb[0].mxu0
    %303 = vdwg.mxu0
    %v304 = vand.u32 %v55, 4294901760
    %305 = vmatprep.subr.mxu0 %v304
    %v306 = vand.u32 %v54, 4294901760
    %307 = vmatpush1.xpose.msra.mxu0 %v306
    %308 = vmatprep.subr.mxu0 0.0
    %309 = vmatpush1.xpose.msra.mxu0 0.0
    %310 = vmatprep.subr.mxu0 0.0
    %311 = vmatpush1.xpose.msra.mxu0 0.0
    %312 = vmatprep.subr.mxu0 0.0
    %313 = vmatpush1.xpose.msra.mxu0 0.0
    %314 = vmatprep.subr.mxu0 0.0
    %315 = vmatpush1.xpose.msra.mxu0 0.0
    %316 = vmatprep.subr.mxu0 0.0
    %317 = vmatpush1.xpose.msra.mxu0 0.0
    %318 = vmatprep.subr.mxu0 0.0
    %319 = vmatpush1.xpose.msra.mxu0 0.0
    %320 = vmatprep.subr.mxu0 0.0
    %321 = vmatpush1.xpose.msra.mxu0 0.0
    %322 = vmatprep.subr.mxu0 0.0
    %323 = vmatpush1.xpose.msra.mxu0 0.0
    %324 = vmatprep.subr.mxu0 0.0
    %325 = vmatpush1.xpose.msra.mxu0 0.0
    %326 = vmatprep.subr.mxu0 0.0
    %327 = vmatpush1.xpose.msra.mxu0 0.0
    %328 = vmatprep.subr.mxu0 0.0
    %329 = vmatpush1.xpose.msra.mxu0 0.0
    %330 = vmatprep.subr.mxu0 0.0
    %331 = vmatpush1.xpose.msra.mxu0 0.0
    %332 = vmatprep.subr.mxu0 0.0
    %333 = vmatpush1.xpose.msra.mxu0 0.0
    %334 = vmatprep.subr.mxu0 0.0
    %335 = vmatpush1.xpose.msra.mxu0 0.0
    %336 = vmatprep.subr.mxu0 0.0
    %337 = vmatpush1.xpose.msra.mxu0 0.0
    %338 = vmatprep.subr.mxu0 0.0
    %339 = vmatpush1.xpose.msra.mxu0 0.0
    %340 = vmatprep.subr.mxu0 0.0
    %341 = vmatpush1.xpose.msra.mxu0 0.0
    %342 = vmatprep.subr.mxu0 0.0
    %343 = vmatpush1.xpose.msra.mxu0 0.0
    %344 = vmatprep.subr.mxu0 0.0
    %345 = vmatpush1.xpose.msra.mxu0 0.0
    %346 = vmatprep.subr.mxu0 0.0
    %347 = vmatpush1.xpose.msra.mxu0 0.0
    %348 = vmatprep.subr.mxu0 0.0
    %349 = vmatpush1.xpose.msra.mxu0 0.0
    %350 = vmatprep.subr.mxu0 0.0
    %351 = vmatpush1.xpose.msra.mxu0 0.0
    %352 = vmatprep.subr.mxu0 0.0
    %353 = vmatpush1.xpose.msra.mxu0 0.0
    %354 = vmatprep.subr.mxu0 0.0
    %355 = vmatpush1.xpose.msra.mxu0 0.0
    %356 = vmatprep.subr.mxu0 0.0
    %357 = vmatpush1.xpose.msra.mxu0 0.0
    %358 = vmatprep.subr.mxu0 0.0
    %359 = vmatpush1.xpose.msra.mxu0 0.0
    %360 = vmatprep.subr.mxu0 0.0
    %361 = vmatpush1.xpose.msra.mxu0 0.0
    %362 = vmatprep.subr.mxu0 0.0
    %363 = vmatpush1.xpose.msra.mxu0 0.0
    %364 = vmatprep.subr.mxu0 0.0
    %365 = vmatpush1.xpose.msra.mxu0 0.0
    %366 = vmatprep.subr.mxu0 0.0
    %367 = vmatpush1.xpose.msra.mxu0 0.0
    %368 = vmatprep.subr.mxu0 0.0
    %369 = vmatpush1.xpose.msra.mxu0 0.0
    %v370 = vand.u32 %v47, 4294901760
    %v371 = vsub.f32 %v47, %v370
    %v372 = vand.u32 %v371, 4294901760
    %373 = vmatprep.mubr.f32.mxu0 %v372
    %v374 = vand.u32 %v46, 4294901760
    %v375 = vsub.f32 %v46, %v374
    %v376 = vand.u32 %v375, 4294901760
    %377 = vmatmul.mubr.f32.gmra.mrb[0].mxu0 %v376
    %v378 = vpop.f32.mrb[0].mxu0
    %v379 = vadd.f32 %v301, %v378
    %v380 = vpop.f32.mrb[0].mxu0
    %381 = vdwg.mxu0
    %v382 = vand.u32 %v55, 4294901760
    %v383 = vsub.f32 %v55, %v382
    %v384 = vand.u32 %v383, 4294901760
    %385 = vmatprep.subr.mxu0 %v384
    %v386 = vand.u32 %v54, 4294901760
    %v387 = vsub.f32 %v54, %v386
    %v388 = vand.u32 %v387, 4294901760
    %389 = vmatpush1.xpose.msra.mxu0 %v388
    %390 = vmatprep.subr.mxu0 0.0
    %391 = vmatpush1.xpose.msra.mxu0 0.0
    %392 = vmatprep.subr.mxu0 0.0
    %393 = vmatpush1.xpose.msra.mxu0 0.0
    %394 = vmatprep.subr.mxu0 0.0
    %395 = vmatpush1.xpose.msra.mxu0 0.0
    %396 = vmatprep.subr.mxu0 0.0
    %397 = vmatpush1.xpose.msra.mxu0 0.0
    %398 = vmatprep.subr.mxu0 0.0
    %399 = vmatpush1.xpose.msra.mxu0 0.0
    %400 = vmatprep.subr.mxu0 0.0
    %401 = vmatpush1.xpose.msra.mxu0 0.0
    %402 = vmatprep.subr.mxu0 0.0
    %403 = vmatpush1.xpose.msra.mxu0 0.0
    %404 = vmatprep.subr.mxu0 0.0
    %405 = vmatpush1.xpose.msra.mxu0 0.0
    %406 = vmatprep.subr.mxu0 0.0
    %407 = vmatpush1.xpose.msra.mxu0 0.0
    %408 = vmatprep.subr.mxu0 0.0
    %409 = vmatpush1.xpose.msra.mxu0 0.0
    %410 = vmatprep.subr.mxu0 0.0
    %411 = vmatpush1.xpose.msra.mxu0 0.0
    %412 = vmatprep.subr.mxu0 0.0
    %413 = vmatpush1.xpose.msra.mxu0 0.0
    %414 = vmatprep.subr.mxu0 0.0
    %415 = vmatpush1.xpose.msra.mxu0 0.0
    %416 = vmatprep.subr.mxu0 0.0
    %417 = vmatpush1.xpose.msra.mxu0 0.0
    %418 = vmatprep.subr.mxu0 0.0
    %419 = vmatpush1.xpose.msra.mxu0 0.0
    %420 = vmatprep.subr.mxu0 0.0
    %421 = vmatpush1.xpose.msra.mxu0 0.0
    %422 = vmatprep.subr.mxu0 0.0
    %423 = vmatpush1.xpose.msra.mxu0 0.0
    %424 = vmatprep.subr.mxu0 0.0
    %425 = vmatpush1.xpose.msra.mxu0 0.0
    %426 = vmatprep.subr.mxu0 0.0
    %427 = vmatpush1.xpose.msra.mxu0 0.0
    %428 = vmatprep.subr.mxu0 0.0
    %429 = vmatpush1.xpose.msra.mxu0 0.0
    %430 = vmatprep.subr.mxu0 0.0
    %431 = vmatpush1.xpose.msra.mxu0 0.0
    %432 = vmatprep.subr.mxu0 0.0
    %433 = vmatpush1.xpose.msra.mxu0 0.0
    %434 = vmatprep.subr.mxu0 0.0
    %435 = vmatpush1.xpose.msra.mxu0 0.0
    %436 = vmatprep.subr.mxu0 0.0
    %437 = vmatpush1.xpose.msra.mxu0 0.0
    %438 = vmatprep.subr.mxu0 0.0
    %439 = vmatpush1.xpose.msra.mxu0 0.0
    %440 = vmatprep.subr.mxu0 0.0
    %441 = vmatpush1.xpose.msra.mxu0 0.0
    %442 = vmatprep.subr.mxu0 0.0
    %443 = vmatpush1.xpose.msra.mxu0 0.0
    %444 = vmatprep.subr.mxu0 0.0
    %445 = vmatpush1.xpose.msra.mxu0 0.0
    %446 = vmatprep.subr.mxu0 0.0
    %447 = vmatpush1.xpose.msra.mxu0 0.0
    %448 = vmatprep.subr.mxu0 0.0
    %449 = vmatpush1.xpose.msra.mxu0 0.0
    %450 = vmatprep.subr.mxu0 0.0
    %451 = vmatpush1.xpose.msra.mxu0 0.0
    %v452 = vand.u32 %v47, 4294901760
    %453 = vmatprep.mubr.f32.mxu0 %v452
    %v454 = vand.u32 %v46, 4294901760
    %455 = vmatmul.mubr.f32.gmra.mrb[0].mxu0 %v454
    %v456 = vpop.f32.mrb[0].mxu0
    %v457 = vadd.f32 %v379, %v456
    %v458 = vpop.f32.mrb[0].mxu0
    %459 = vdwg.mxu0
    %v460 = vand.u32 %v55, 4294901760
    %461 = vmatprep.subr.mxu0 %v460
    %v462 = vand.u32 %v54, 4294901760
    %463 = vmatpush1.xpose.msra.mxu0 %v462
    %464 = vmatprep.subr.mxu0 0.0
    %465 = vmatpush1.xpose.msra.mxu0 0.0
    %466 = vmatprep.subr.mxu0 0.0
    %467 = vmatpush1.xpose.msra.mxu0 0.0
    %468 = vmatprep.subr.mxu0 0.0
    %469 = vmatpush1.xpose.msra.mxu0 0.0
    %470 = vmatprep.subr.mxu0 0.0
    %471 = vmatpush1.xpose.msra.mxu0 0.0
    %472 = vmatprep.subr.mxu0 0.0
    %473 = vmatpush1.xpose.msra.mxu0 0.0
    %474 = vmatprep.subr.mxu0 0.0
    %475 = vmatpush1.xpose.msra.mxu0 0.0
    %476 = vmatprep.subr.mxu0 0.0
    %477 = vmatpush1.xpose.msra.mxu0 0.0
    %478 = vmatprep.subr.mxu0 0.0
    %479 = vmatpush1.xpose.msra.mxu0 0.0
    %480 = vmatprep.subr.mxu0 0.0
    %481 = vmatpush1.xpose.msra.mxu0 0.0
    %482 = vmatprep.subr.mxu0 0.0
    %483 = vmatpush1.xpose.msra.mxu0 0.0
    %484 = vmatprep.subr.mxu0 0.0
    %485 = vmatpush1.xpose.msra.mxu0 0.0
    %486 = vmatprep.subr.mxu0 0.0
    %487 = vmatpush1.xpose.msra.mxu0 0.0
    %488 = vmatprep.subr.mxu0 0.0
    %489 = vmatpush1.xpose.msra.mxu0 0.0
    %490 = vmatprep.subr.mxu0 0.0
    %491 = vmatpush1.xpose.msra.mxu0 0.0
    %492 = vmatprep.subr.mxu0 0.0
    %493 = vmatpush1.xpose.msra.mxu0 0.0
    %494 = vmatprep.subr.mxu0 0.0
    %495 = vmatpush1.xpose.msra.mxu0 0.0
    %496 = vmatprep.subr.mxu0 0.0
    %497 = vmatpush1.xpose.msra.mxu0 0.0
    %498 = vmatprep.subr.mxu0 0.0
    %499 = vmatpush1.xpose.msra.mxu0 0.0
    %500 = vmatprep.subr.mxu0 0.0
    %501 = vmatpush1.xpose.msra.mxu0 0.0
    %502 = vmatprep.subr.mxu0 0.0
    %503 = vmatpush1.xpose.msra.mxu0 0.0
    %504 = vmatprep.subr.mxu0 0.0
    %505 = vmatpush1.xpose.msra.mxu0 0.0
    %506 = vmatprep.subr.mxu0 0.0
    %507 = vmatpush1.xpose.msra.mxu0 0.0
    %508 = vmatprep.subr.mxu0 0.0
    %509 = vmatpush1.xpose.msra.mxu0 0.0
    %510 = vmatprep.subr.mxu0 0.0
    %511 = vmatpush1.xpose.msra.mxu0 0.0
    %512 = vmatprep.subr.mxu0 0.0
    %513 = vmatpush1.xpose.msra.mxu0 0.0
    %514 = vmatprep.subr.mxu0 0.0
    %515 = vmatpush1.xpose.msra.mxu0 0.0
    %516 = vmatprep.subr.mxu0 0.0
    %517 = vmatpush1.xpose.msra.mxu0 0.0
    %518 = vmatprep.subr.mxu0 0.0
    %519 = vmatpush1.xpose.msra.mxu0 0.0
    %520 = vmatprep.subr.mxu0 0.0
    %521 = vmatpush1.xpose.msra.mxu0 0.0
    %522 = vmatprep.subr.mxu0 0.0
    %523 = vmatpush1.xpose.msra.mxu0 0.0
    %524 = vmatprep.subr.mxu0 0.0
    %525 = vmatpush1.xpose.msra.mxu0 0.0
    %v526 = vand.u32 %v47, 4294901760
    %527 = vmatprep.mubr.f32.mxu0 %v526
    %v528 = vand.u32 %v46, 4294901760
    %529 = vmatmul.mubr.f32.gmra.mrb[0].mxu0 %v528
    %v530 = vpop.f32.mrb[0].mxu0
    %v531 = vadd.f32 %v457, %v530
    %v532 = vpop.f32.mrb[0].mxu0
    %533 = vdwg.mxu0
    %v534 = vand.u32 %v57, 4294901760
    %535 = vmatprep.subr.mxu0 %v534
    %v536 = vand.u32 %v56, 4294901760
    %537 = vmatpush1.xpose.msra.mxu0 %v536
    %538 = vmatprep.subr.mxu0 0.0
    %539 = vmatpush1.xpose.msra.mxu0 0.0
    %540 = vmatprep.subr.mxu0 0.0
    %541 = vmatpush1.xpose.msra.mxu0 0.0
    %542 = vmatprep.subr.mxu0 0.0
    %543 = vmatpush1.xpose.msra.mxu0 0.0
    %544 = vmatprep.subr.mxu0 0.0
    %545 = vmatpush1.xpose.msra.mxu0 0.0
    %546 = vmatprep.subr.mxu0 0.0
    %547 = vmatpush1.xpose.msra.mxu0 0.0
    %548 = vmatprep.subr.mxu0 0.0
    %549 = vmatpush1.xpose.msra.mxu0 0.0
    %550 = vmatprep.subr.mxu0 0.0
    %551 = vmatpush1.xpose.msra.mxu0 0.0
    %552 = vmatprep.subr.mxu0 0.0
    %553 = vmatpush1.xpose.msra.mxu0 0.0
    %554 = vmatprep.subr.mxu0 0.0
    %555 = vmatpush1.xpose.msra.mxu0 0.0
    %556 = vmatprep.subr.mxu0 0.0
    %557 = vmatpush1.xpose.msra.mxu0 0.0
    %558 = vmatprep.subr.mxu0 0.0
    %559 = vmatpush1.xpose.msra.mxu0 0.0
    %560 = vmatprep.subr.mxu0 0.0
    %561 = vmatpush1.xpose.msra.mxu0 0.0
    %562 = vmatprep.subr.mxu0 0.0
    %563 = vmatpush1.xpose.msra.mxu0 0.0
    %564 = vmatprep.subr.mxu0 0.0
    %565 = vmatpush1.xpose.msra.mxu0 0.0
    %566 = vmatprep.subr.mxu0 0.0
    %567 = vmatpush1.xpose.msra.mxu0 0.0
    %568 = vmatprep.subr.mxu0 0.0
    %569 = vmatpush1.xpose.msra.mxu0 0.0
    %570 = vmatprep.subr.mxu0 0.0
    %571 = vmatpush1.xpose.msra.mxu0 0.0
    %572 = vmatprep.subr.mxu0 0.0
    %573 = vmatpush1.xpose.msra.mxu0 0.0
    %574 = vmatprep.subr.mxu0 0.0
    %575 = vmatpush1.xpose.msra.mxu0 0.0
    %576 = vmatprep.subr.mxu0 0.0
    %577 = vmatpush1.xpose.msra.mxu0 0.0
    %578 = vmatprep.subr.mxu0 0.0
    %579 = vmatpush1.xpose.msra.mxu0 0.0
    %580 = vmatprep.subr.mxu0 0.0
    %581 = vmatpush1.xpose.msra.mxu0 0.0
    %582 = vmatprep.subr.mxu0 0.0
    %583 = vmatpush1.xpose.msra.mxu0 0.0
    %584 = vmatprep.subr.mxu0 0.0
    %585 = vmatpush1.xpose.msra.mxu0 0.0
    %586 = vmatprep.subr.mxu0 0.0
    %587 = vmatpush1.xpose.msra.mxu0 0.0
    %588 = vmatprep.subr.mxu0 0.0
    %589 = vmatpush1.xpose.msra.mxu0 0.0
    %590 = vmatprep.subr.mxu0 0.0
    %591 = vmatpush1.xpose.msra.mxu0 0.0
    %592 = vmatprep.subr.mxu0 0.0
    %593 = vmatpush1.xpose.msra.mxu0 0.0
    %594 = vmatprep.subr.mxu0 0.0
    %595 = vmatpush1.xpose.msra.mxu0 0.0
    %596 = vmatprep.subr.mxu0 0.0
    %597 = vmatpush1.xpose.msra.mxu0 0.0
    %598 = vmatprep.subr.mxu0 0.0
    %599 = vmatpush1.xpose.msra.mxu0 0.0
    %v600 = vand.u32 %v49, 4294901760
    %v601 = vsub.f32 %v49, %v600
    %v602 = vand.u32 %v601, 4294901760
    %v603 = vsub.f32 %v601, %v602
    %v604 = vand.u32 %v603, 4294901760
    %605 = vmatprep.mubr.f32.mxu0 %v604
    %v606 = vand.u32 %v48, 4294901760
    %v607 = vsub.f32 %v48, %v606
    %v608 = vand.u32 %v607, 4294901760
    %v609 = vsub.f32 %v607, %v608
    %v610 = vand.u32 %v609, 4294901760
    %611 = vmatmul.mubr.f32.gmra.mrb[0].mxu0 %v610
    %v612 = vpop.f32.mrb[0].mxu0
    %v613 = vadd.f32 %v531, %v612
    %v614 = vpop.f32.mrb[0].mxu0
    %615 = vdwg.mxu0
    %v616 = vand.u32 %v57, 4294901760
    %v617 = vsub.f32 %v57, %v616
    %v618 = vand.u32 %v617, 4294901760
    %v619 = vsub.f32 %v617, %v618
    %v620 = vand.u32 %v619, 4294901760
    %621 = vmatprep.subr.mxu0 %v620
    %v622 = vand.u32 %v56, 4294901760
    %v623 = vsub.f32 %v56, %v622
    %v624 = vand.u32 %v623, 4294901760
    %v625 = vsub.f32 %v623, %v624
    %v626 = vand.u32 %v625, 4294901760
    %627 = vmatpush1.xpose.msra.mxu0 %v626
    %628 = vmatprep.subr.mxu0 0.0
    %629 = vmatpush1.xpose.msra.mxu0 0.0
    %630 = vmatprep.subr.mxu0 0.0
    %631 = vmatpush1.xpose.msra.mxu0 0.0
    %632 = vmatprep.subr.mxu0 0.0
    %633 = vmatpush1.xpose.msra.mxu0 0.0
    %634 = vmatprep.subr.mxu0 0.0
    %635 = vmatpush1.xpose.msra.mxu0 0.0
    %636 = vmatprep.subr.mxu0 0.0
    %637 = vmatpush1.xpose.msra.mxu0 0.0
    %638 = vmatprep.subr.mxu0 0.0
    %639 = vmatpush1.xpose.msra.mxu0 0.0
    %640 = vmatprep.subr.mxu0 0.0
    %641 = vmatpush1.xpose.msra.mxu0 0.0
    %642 = vmatprep.subr.mxu0 0.0
    %643 = vmatpush1.xpose.msra.mxu0 0.0
    %644 = vmatprep.subr.mxu0 0.0
    %645 = vmatpush1.xpose.msra.mxu0 0.0
    %646 = vmatprep.subr.mxu0 0.0
    %647 = vmatpush1.xpose.msra.mxu0 0.0
    %648 = vmatprep.subr.mxu0 0.0
    %649 = vmatpush1.xpose.msra.mxu0 0.0
    %650 = vmatprep.subr.mxu0 0.0
    %651 = vmatpush1.xpose.msra.mxu0 0.0
    %652 = vmatprep.subr.mxu0 0.0
    %653 = vmatpush1.xpose.msra.mxu0 0.0
    %654 = vmatprep.subr.mxu0 0.0
    %655 = vmatpush1.xpose.msra.mxu0 0.0
    %656 = vmatprep.subr.mxu0 0.0
    %657 = vmatpush1.xpose.msra.mxu0 0.0
    %658 = vmatprep.subr.mxu0 0.0
    %659 = vmatpush1.xpose.msra.mxu0 0.0
    %660 = vmatprep.subr.mxu0 0.0
    %661 = vmatpush1.xpose.msra.mxu0 0.0
    %662 = vmatprep.subr.mxu0 0.0
    %663 = vmatpush1.xpose.msra.mxu0 0.0
    %664 = vmatprep.subr.mxu0 0.0
    %665 = vmatpush1.xpose.msra.mxu0 0.0
    %666 = vmatprep.subr.mxu0 0.0
    %667 = vmatpush1.xpose.msra.mxu0 0.0
    %668 = vmatprep.subr.mxu0 0.0
    %669 = vmatpush1.xpose.msra.mxu0 0.0
    %670 = vmatprep.subr.mxu0 0.0
    %671 = vmatpush1.xpose.msra.mxu0 0.0
    %672 = vmatprep.subr.mxu0 0.0
    %673 = vmatpush1.xpose.msra.mxu0 0.0
    %674 = vmatprep.subr.mxu0 0.0
    %675 = vmatpush1.xpose.msra.mxu0 0.0
    %676 = vmatprep.subr.mxu0 0.0
    %677 = vmatpush1.xpose.msra.mxu0 0.0
    %678 = vmatprep.subr.mxu0 0.0
    %679 = vmatpush1.xpose.msra.mxu0 0.0
    %680 = vmatprep.subr.mxu0 0.0
    %681 = vmatpush1.xpose.msra.mxu0 0.0
    %682 = vmatprep.subr.mxu0 0.0
    %683 = vmatpush1.xpose.msra.mxu0 0.0
    %684 = vmatprep.subr.mxu0 0.0
    %685 = vmatpush1.xpose.msra.mxu0 0.0
    %686 = vmatprep.subr.mxu0 0.0
    %687 = vmatpush1.xpose.msra.mxu0 0.0
    %688 = vmatprep.subr.mxu0 0.0
    %689 = vmatpush1.xpose.msra.mxu0 0.0
    %v690 = vand.u32 %v49, 4294901760
    %691 = vmatprep.mubr.f32.mxu0 %v690
    %v692 = vand.u32 %v48, 4294901760
    %693 = vmatmul.mubr.f32.gmra.mrb[0].mxu0 %v692
    %v694 = vpop.f32.mrb[0].mxu0
    %v695 = vadd.f32 %v613, %v694
    %v696 = vpop.f32.mrb[0].mxu0
    %697 = vdwg.mxu0
    %v698 = vand.u32 %v57, 4294901760
    %v699 = vsub.f32 %v57, %v698
    %700 = vmatprep.subr.mxu0 %v699
    %v701 = vand.u32 %v56, 4294901760
    %v702 = vsub.f32 %v56, %v701
    %703 = vmatpush1.xpose.msra.mxu0 %v702
    %704 = vmatprep.subr.mxu0 0.0
    %705 = vmatpush1.xpose.msra.mxu0 0.0
    %706 = vmatprep.subr.mxu0 0.0
    %707 = vmatpush1.xpose.msra.mxu0 0.0
    %708 = vmatprep.subr.mxu0 0.0
    %709 = vmatpush1.xpose.msra.mxu0 0.0
    %710 = vmatprep.subr.mxu0 0.0
    %711 = vmatpush1.xpose.msra.mxu0 0.0
    %712 = vmatprep.subr.mxu0 0.0
    %713 = vmatpush1.xpose.msra.mxu0 0.0
    %714 = vmatprep.subr.mxu0 0.0
    %715 = vmatpush1.xpose.msra.mxu0 0.0
    %716 = vmatprep.subr.mxu0 0.0
    %717 = vmatpush1.xpose.msra.mxu0 0.0
    %718 = vmatprep.subr.mxu0 0.0
    %719 = vmatpush1.xpose.msra.mxu0 0.0
    %720 = vmatprep.subr.mxu0 0.0
    %721 = vmatpush1.xpose.msra.mxu0 0.0
    %722 = vmatprep.subr.mxu0 0.0
    %723 = vmatpush1.xpose.msra.mxu0 0.0
    %724 = vmatprep.subr.mxu0 0.0
    %725 = vmatpush1.xpose.msra.mxu0 0.0
    %726 = vmatprep.subr.mxu0 0.0
    %727 = vmatpush1.xpose.msra.mxu0 0.0
    %728 = vmatprep.subr.mxu0 0.0
    %729 = vmatpush1.xpose.msra.mxu0 0.0
    %730 = vmatprep.subr.mxu0 0.0
    %731 = vmatpush1.xpose.msra.mxu0 0.0
    %732 = vmatprep.subr.mxu0 0.0
    %733 = vmatpush1.xpose.msra.mxu0 0.0
    %734 = vmatprep.subr.mxu0 0.0
    %735 = vmatpush1.xpose.msra.mxu0 0.0
    %736 = vmatprep.subr.mxu0 0.0
    %737 = vmatpush1.xpose.msra.mxu0 0.0
    %738 = vmatprep.subr.mxu0 0.0
    %739 = vmatpush1.xpose.msra.mxu0 0.0
    %740 = vmatprep.subr.mxu0 0.0
    %741 = vmatpush1.xpose.msra.mxu0 0.0
    %742 = vmatprep.subr.mxu0 0.0
    %743 = vmatpush1.xpose.msra.mxu0 0.0
    %744 = vmatprep.subr.mxu0 0.0
    %745 = vmatpush1.xpose.msra.mxu0 0.0
    %746 = vmatprep.subr.mxu0 0.0
    %747 = vmatpush1.xpose.msra.mxu0 0.0
    %748 = vmatprep.subr.mxu0 0.0
    %749 = vmatpush1.xpose.msra.mxu0 0.0
    %750 = vmatprep.subr.mxu0 0.0
    %751 = vmatpush1.xpose.msra.mxu0 0.0
    %752 = vmatprep.subr.mxu0 0.0
    %753 = vmatpush1.xpose.msra.mxu0 0.0
    %754 = vmatprep.subr.mxu0 0.0
    %755 = vmatpush1.xpose.msra.mxu0 0.0
    %756 = vmatprep.subr.mxu0 0.0
    %757 = vmatpush1.xpose.msra.mxu0 0.0
    %758 = vmatprep.subr.mxu0 0.0
    %759 = vmatpush1.xpose.msra.mxu0 0.0
    %760 = vmatprep.subr.mxu0 0.0
    %761 = vmatpush1.xpose.msra.mxu0 0.0
    %762 = vmatprep.subr.mxu0 0.0
    %763 = vmatpush1.xpose.msra.mxu0 0.0
    %764 = vmatprep.subr.mxu0 0.0
    %765 = vmatpush1.xpose.msra.mxu0 0.0
    %v766 = vand.u32 %v49, 4294901760
    %v767 = vsub.f32 %v49, %v766
    %768 = vmatprep.mubr.f32.mxu0 %v767
    %v769 = vand.u32 %v48, 4294901760
    %v770 = vsub.f32 %v48, %v769
    %771 = vmatmul.mubr.f32.gmra.mrb[0].mxu0 %v770
    %v772 = vpop.f32.mrb[0].mxu0
    %v773 = vadd.f32 %v695, %v772
    %v774 = vpop.f32.mrb[0].mxu0
    %775 = vdwg.mxu0
    %v776 = vand.u32 %v57, 4294901760
    %777 = vmatprep.subr.mxu0 %v776
    %v778 = vand.u32 %v56, 4294901760
    %779 = vmatpush1.xpose.msra.mxu0 %v778
    %780 = vmatprep.subr.mxu0 0.0
    %781 = vmatpush1.xpose.msra.mxu0 0.0
    %782 = vmatprep.subr.mxu0 0.0
    %783 = vmatpush1.xpose.msra.mxu0 0.0
    %784 = vmatprep.subr.mxu0 0.0
    %785 = vmatpush1.xpose.msra.mxu0 0.0
    %786 = vmatprep.subr.mxu0 0.0
    %787 = vmatpush1.xpose.msra.mxu0 0.0
    %788 = vmatprep.subr.mxu0 0.0
    %789 = vmatpush1.xpose.msra.mxu0 0.0
    %790 = vmatprep.subr.mxu0 0.0
    %791 = vmatpush1.xpose.msra.mxu0 0.0
    %792 = vmatprep.subr.mxu0 0.0
    %793 = vmatpush1.xpose.msra.mxu0 0.0
    %794 = vmatprep.subr.mxu0 0.0
    %795 = vmatpush1.xpose.msra.mxu0 0.0
    %796 = vmatprep.subr.mxu0 0.0
    %797 = vmatpush1.xpose.msra.mxu0 0.0
    %798 = vmatprep.subr.mxu0 0.0
    %799 = vmatpush1.xpose.msra.mxu0 0.0
    %800 = vmatprep.subr.mxu0 0.0
    %801 = vmatpush1.xpose.msra.mxu0 0.0
    %802 = vmatprep.subr.mxu0 0.0
    %803 = vmatpush1.xpose.msra.mxu0 0.0
    %804 = vmatprep.subr.mxu0 0.0
    %805 = vmatpush1.xpose.msra.mxu0 0.0
    %806 = vmatprep.subr.mxu0 0.0
    %807 = vmatpush1.xpose.msra.mxu0 0.0
    %808 = vmatprep.subr.mxu0 0.0
    %809 = vmatpush1.xpose.msra.mxu0 0.0
    %810 = vmatprep.subr.mxu0 0.0
    %811 = vmatpush1.xpose.msra.mxu0 0.0
    %812 = vmatprep.subr.mxu0 0.0
    %813 = vmatpush1.xpose.msra.mxu0 0.0
    %814 = vmatprep.subr.mxu0 0.0
    %815 = vmatpush1.xpose.msra.mxu0 0.0
    %816 = vmatprep.subr.mxu0 0.0
    %817 = vmatpush1.xpose.msra.mxu0 0.0
    %818 = vmatprep.subr.mxu0 0.0
    %819 = vmatpush1.xpose.msra.mxu0 0.0
    %820 = vmatprep.subr.mxu0 0.0
    %821 = vmatpush1.xpose.msra.mxu0 0.0
    %822 = vmatprep.subr.mxu0 0.0
    %823 = vmatpush1.xpose.msra.mxu0 0.0
    %824 = vmatprep.subr.mxu0 0.0
    %825 = vmatpush1.xpose.msra.mxu0 0.0
    %826 = vmatprep.subr.mxu0 0.0
    %827 = vmatpush1.xpose.msra.mxu0 0.0
    %828 = vmatprep.subr.mxu0 0.0
    %829 = vmatpush1.xpose.msra.mxu0 0.0
    %830 = vmatprep.subr.mxu0 0.0
    %831 = vmatpush1.xpose.msra.mxu0 0.0
    %832 = vmatprep.subr.mxu0 0.0
    %833 = vmatpush1.xpose.msra.mxu0 0.0
    %834 = vmatprep.subr.mxu0 0.0
    %835 = vmatpush1.xpose.msra.mxu0 0.0
    %836 = vmatprep.subr.mxu0 0.0
    %837 = vmatpush1.xpose.msra.mxu0 0.0
    %838 = vmatprep.subr.mxu0 0.0
    %839 = vmatpush1.xpose.msra.mxu0 0.0
    %840 = vmatprep.subr.mxu0 0.0
    %841 = vmatpush1.xpose.msra.mxu0 0.0
    %v842 = vand.u32 %v49, 4294901760
    %v843 = vsub.f32 %v49, %v842
    %v844 = vand.u32 %v843, 4294901760
    %845 = vmatprep.mubr.f32.mxu0 %v844
    %v846 = vand.u32 %v48, 4294901760
    %v847 = vsub.f32 %v48, %v846
    %v848 = vand.u32 %v847, 4294901760
    %849 = vmatmul.mubr.f32.gmra.mrb[0].mxu0 %v848
    %v850 = vpop.f32.mrb[0].mxu0
    %v851 = vadd.f32 %v773, %v850
    %v852 = vpop.f32.mrb[0].mxu0
    %853 = vdwg.mxu0
    %v854 = vand.u32 %v57, 4294901760
    %v855 = vsub.f32 %v57, %v854
    %v856 = vand.u32 %v855, 4294901760
    %857 = vmatprep.subr.mxu0 %v856
    %v858 = vand.u32 %v56, 4294901760
    %v859 = vsub.f32 %v56, %v858
    %v860 = vand.u32 %v859, 4294901760
    %861 = vmatpush1.xpose.msra.mxu0 %v860
    %862 = vmatprep.subr.mxu0 0.0
    %863 = vmatpush1.xpose.msra.mxu0 0.0
    %864 = vmatprep.subr.mxu0 0.0
    %865 = vmatpush1.xpose.msra.mxu0 0.0
    %866 = vmatprep.subr.mxu0 0.0
    %867 = vmatpush1.xpose.msra.mxu0 0.0
    %868 = vmatprep.subr.mxu0 0.0
    %869 = vmatpush1.xpose.msra.mxu0 0.0
    %870 = vmatprep.subr.mxu0 0.0
    %871 = vmatpush1.xpose.msra.mxu0 0.0
    %872 = vmatprep.subr.mxu0 0.0
    %873 = vmatpush1.xpose.msra.mxu0 0.0
    %874 = vmatprep.subr.mxu0 0.0
    %875 = vmatpush1.xpose.msra.mxu0 0.0
    %876 = vmatprep.subr.mxu0 0.0
    %877 = vmatpush1.xpose.msra.mxu0 0.0
    %878 = vmatprep.subr.mxu0 0.0
    %879 = vmatpush1.xpose.msra.mxu0 0.0
    %880 = vmatprep.subr.mxu0 0.0
    %881 = vmatpush1.xpose.msra.mxu0 0.0
    %882 = vmatprep.subr.mxu0 0.0
    %883 = vmatpush1.xpose.msra.mxu0 0.0
    %884 = vmatprep.subr.mxu0 0.0
    %885 = vmatpush1.xpose.msra.mxu0 0.0
    %886 = vmatprep.subr.mxu0 0.0
    %887 = vmatpush1.xpose.msra.mxu0 0.0
    %888 = vmatprep.subr.mxu0 0.0
    %889 = vmatpush1.xpose.msra.mxu0 0.0
    %890 = vmatprep.subr.mxu0 0.0
    %891 = vmatpush1.xpose.msra.mxu0 0.0
    %892 = vmatprep.subr.mxu0 0.0
    %893 = vmatpush1.xpose.msra.mxu0 0.0
    %894 = vmatprep.subr.mxu0 0.0
    %895 = vmatpush1.xpose.msra.mxu0 0.0
    %896 = vmatprep.subr.mxu0 0.0
    %897 = vmatpush1.xpose.msra.mxu0 0.0
    %898 = vmatprep.subr.mxu0 0.0
    %899 = vmatpush1.xpose.msra.mxu0 0.0
    %900 = vmatprep.subr.mxu0 0.0
    %901 = vmatpush1.xpose.msra.mxu0 0.0
    %902 = vmatprep.subr.mxu0 0.0
    %903 = vmatpush1.xpose.msra.mxu0 0.0
    %904 = vmatprep.subr.mxu0 0.0
    %905 = vmatpush1.xpose.msra.mxu0 0.0
    %906 = vmatprep.subr.mxu0 0.0
    %907 = vmatpush1.xpose.msra.mxu0 0.0
    %908 = vmatprep.subr.mxu0 0.0
    %909 = vmatpush1.xpose.msra.mxu0 0.0
    %910 = vmatprep.subr.mxu0 0.0
    %911 = vmatpush1.xpose.msra.mxu0 0.0
    %912 = vmatprep.subr.mxu0 0.0
    %913 = vmatpush1.xpose.msra.mxu0 0.0
    %914 = vmatprep.subr.mxu0 0.0
    %915 = vmatpush1.xpose.msra.mxu0 0.0
    %916 = vmatprep.subr.mxu0 0.0
    %917 = vmatpush1.xpose.msra.mxu0 0.0
    %918 = vmatprep.subr.mxu0 0.0
    %919 = vmatpush1.xpose.msra.mxu0 0.0
    %920 = vmatprep.subr.mxu0 0.0
    %921 = vmatpush1.xpose.msra.mxu0 0.0
    %922 = vmatprep.subr.mxu0 0.0
    %923 = vmatpush1.xpose.msra.mxu0 0.0
    %v924 = vand.u32 %v49, 4294901760
    %925 = vmatprep.mubr.f32.mxu0 %v924
    %v926 = vand.u32 %v48, 4294901760
    %927 = vmatmul.mubr.f32.gmra.mrb[0].mxu0 %v926
    %v928 = vpop.f32.mrb[0].mxu0
    %v929 = vadd.f32 %v851, %v928
    %v930 = vpop.f32.mrb[0].mxu0
    %931 = vdwg.mxu0
    %v932 = vand.u32 %v57, 4294901760
    %933 = vmatprep.subr.mxu0 %v932
    %v934 = vand.u32 %v56, 4294901760
    %935 = vmatpush1.xpose.msra.mxu0 %v934
    %936 = vmatprep.subr.mxu0 0.0
    %937 = vmatpush1.xpose.msra.mxu0 0.0
    %938 = vmatprep.subr.mxu0 0.0
    %939 = vmatpush1.xpose.msra.mxu0 0.0
    %940 = vmatprep.subr.mxu0 0.0
    %941 = vmatpush1.xpose.msra.mxu0 0.0
    %942 = vmatprep.subr.mxu0 0.0
    %943 = vmatpush1.xpose.msra.mxu0 0.0
    %944 = vmatprep.subr.mxu0 0.0
    %945 = vmatpush1.xpose.msra.mxu0 0.0
    %946 = vmatprep.subr.mxu0 0.0
    %947 = vmatpush1.xpose.msra.mxu0 0.0
    %948 = vmatprep.subr.mxu0 0.0
    %949 = vmatpush1.xpose.msra.mxu0 0.0
    %950 = vmatprep.subr.mxu0 0.0
    %951 = vmatpush1.xpose.msra.mxu0 0.0
    %952 = vmatprep.subr.mxu0 0.0
    %953 = vmatpush1.xpose.msra.mxu0 0.0
    %954 = vmatprep.subr.mxu0 0.0
    %955 = vmatpush1.xpose.msra.mxu0 0.0
    %956 = vmatprep.subr.mxu0 0.0
    %957 = vmatpush1.xpose.msra.mxu0 0.0
    %958 = vmatprep.subr.mxu0 0.0
    %959 = vmatpush1.xpose.msra.mxu0 0.0
    %960 = vmatprep.subr.mxu0 0.0
    %961 = vmatpush1.xpose.msra.mxu0 0.0
    %962 = vmatprep.subr.mxu0 0.0
    %963 = vmatpush1.xpose.msra.mxu0 0.0
    %964 = vmatprep.subr.mxu0 0.0
    %965 = vmatpush1.xpose.msra.mxu0 0.0
    %966 = vmatprep.subr.mxu0 0.0
    %967 = vmatpush1.xpose.msra.mxu0 0.0
    %968 = vmatprep.subr.mxu0 0.0
    %969 = vmatpush1.xpose.msra.mxu0 0.0
    %970 = vmatprep.subr.mxu0 0.0
    %971 = vmatpush1.xpose.msra.mxu0 0.0
    %972 = vmatprep.subr.mxu0 0.0
    %973 = vmatpush1.xpose.msra.mxu0 0.0
    %974 = vmatprep.subr.mxu0 0.0
    %975 = vmatpush1.xpose.msra.mxu0 0.0
    %976 = vmatprep.subr.mxu0 0.0
    %977 = vmatpush1.xpose.msra.mxu0 0.0
    %978 = vmatprep.subr.mxu0 0.0
    %979 = vmatpush1.xpose.msra.mxu0 0.0
    %980 = vmatprep.subr.mxu0 0.0
    %981 = vmatpush1.xpose.msra.mxu0 0.0
    %982 = vmatprep.subr.mxu0 0.0
    %983 = vmatpush1.xpose.msra.mxu0 0.0
    %984 = vmatprep.subr.mxu0 0.0
    %985 = vmatpush1.xpose.msra.mxu0 0.0
    %986 = vmatprep.subr.mxu0 0.0
    %987 = vmatpush1.xpose.msra.mxu0 0.0
    %988 = vmatprep.subr.mxu0 0.0
    %989 = vmatpush1.xpose.msra.mxu0 0.0
    %990 = vmatprep.subr.mxu0 0.0
    %991 = vmatpush1.xpose.msra.mxu0 0.0
    %992 = vmatprep.subr.mxu0 0.0
    %993 = vmatpush1.xpose.msra.mxu0 0.0
    %994 = vmatprep.subr.mxu0 0.0
    %995 = vmatpush1.xpose.msra.mxu0 0.0
    %996 = vmatprep.subr.mxu0 0.0
    %997 = vmatpush1.xpose.msra.mxu0 0.0
    %v998 = vand.u32 %v49, 4294901760
    %999 = vmatprep.mubr.f32.mxu0 %v998
    %v1000 = vand.u32 %v48, 4294901760
    %1001 = vmatmul.mubr.f32.gmra.mrb[0].mxu0 %v1000
    %v1002 = vpop.f32.mrb[0].mxu0
    %v1003 = vadd.f32 %v929, %v1002
    %v1004 = vpop.f32.mrb[0].mxu0
    %1005 = vdwg.mxu0
    %v1006 = vand.u32 %v59, 4294901760
    %1007 = vmatprep.subr.mxu0 %v1006
    %v1008 = vand.u32 %v58, 4294901760
    %1009 = vmatpush1.xpose.msra.mxu0 %v1008
    %1010 = vmatprep.subr.mxu0 0.0
    %1011 = vmatpush1.xpose.msra.mxu0 0.0
    %1012 = vmatprep.subr.mxu0 0.0
    %1013 = vmatpush1.xpose.msra.mxu0 0.0
    %1014 = vmatprep.subr.mxu0 0.0
    %1015 = vmatpush1.xpose.msra.mxu0 0.0
    %1016 = vmatprep.subr.mxu0 0.0
    %1017 = vmatpush1.xpose.msra.mxu0 0.0
    %1018 = vmatprep.subr.mxu0 0.0
    %1019 = vmatpush1.xpose.msra.mxu0 0.0
    %1020 = vmatprep.subr.mxu0 0.0
    %1021 = vmatpush1.xpose.msra.mxu0 0.0
    %1022 = vmatprep.subr.mxu0 0.0
    %1023 = vmatpush1.xpose.msra.mxu0 0.0
    %1024 = vmatprep.subr.mxu0 0.0
    %1025 = vmatpush1.xpose.msra.mxu0 0.0
    %1026 = vmatprep.subr.mxu0 0.0
    %1027 = vmatpush1.xpose.msra.mxu0 0.0
    %1028 = vmatprep.subr.mxu0 0.0
    %1029 = vmatpush1.xpose.msra.mxu0 0.0
    %1030 = vmatprep.subr.mxu0 0.0
    %1031 = vmatpush1.xpose.msra.mxu0 0.0
    %1032 = vmatprep.subr.mxu0 0.0
    %1033 = vmatpush1.xpose.msra.mxu0 0.0
    %1034 = vmatprep.subr.mxu0 0.0
    %1035 = vmatpush1.xpose.msra.mxu0 0.0
    %1036 = vmatprep.subr.mxu0 0.0
    %1037 = vmatpush1.xpose.msra.mxu0 0.0
    %1038 = vmatprep.subr.mxu0 0.0
    %1039 = vmatpush1.xpose.msra.mxu0 0.0
    %1040 = vmatprep.subr.mxu0 0.0
    %1041 = vmatpush1.xpose.msra.mxu0 0.0
    %1042 = vmatprep.subr.mxu0 0.0
    %1043 = vmatpush1.xpose.msra.mxu0 0.0
    %1044 = vmatprep.subr.mxu0 0.0
    %1045 = vmatpush1.xpose.msra.mxu0 0.0
    %1046 = vmatprep.subr.mxu0 0.0
    %1047 = vmatpush1.xpose.msra.mxu0 0.0
    %1048 = vmatprep.subr.mxu0 0.0
    %1049 = vmatpush1.xpose.msra.mxu0 0.0
    %1050 = vmatprep.subr.mxu0 0.0
    %1051 = vmatpush1.xpose.msra.mxu0 0.0
    %1052 = vmatprep.subr.mxu0 0.0
    %1053 = vmatpush1.xpose.msra.mxu0 0.0
    %1054 = vmatprep.subr.mxu0 0.0
    %1055 = vmatpush1.xpose.msra.mxu0 0.0
    %1056 = vmatprep.subr.mxu0 0.0
    %1057 = vmatpush1.xpose.msra.mxu0 0.0
    %1058 = vmatprep.subr.mxu0 0.0
    %1059 = vmatpush1.xpose.msra.mxu0 0.0
    %1060 = vmatprep.subr.mxu0 0.0
    %1061 = vmatpush1.xpose.msra.mxu0 0.0
    %1062 = vmatprep.subr.mxu0 0.0
    %1063 = vmatpush1.xpose.msra.mxu0 0.0
    %1064 = vmatprep.subr.mxu0 0.0
    %1065 = vmatpush1.xpose.msra.mxu0 0.0
    %1066 = vmatprep.subr.mxu0 0.0
    %1067 = vmatpush1.xpose.msra.mxu0 0.0
    %1068 = vmatprep.subr.mxu0 0.0
    %1069 = vmatpush1.xpose.msra.mxu0 0.0
    %1070 = vmatprep.subr.mxu0 0.0
    %1071 = vmatpush1.xpose.msra.mxu0 0.0
    %v1072 = vand.u32 %v51, 4294901760
    %v1073 = vsub.f32 %v51, %v1072
    %v1074 = vand.u32 %v1073, 4294901760
    %v1075 = vsub.f32 %v1073, %v1074
    %v1076 = vand.u32 %v1075, 4294901760
    %1077 = vmatprep.mubr.f32.mxu0 %v1076
    %v1078 = vand.u32 %v50, 4294901760
    %v1079 = vsub.f32 %v50, %v1078
    %v1080 = vand.u32 %v1079, 4294901760
    %v1081 = vsub.f32 %v1079, %v1080
    %v1082 = vand.u32 %v1081, 4294901760
    %1083 = vmatmul.mubr.f32.gmra.mrb[0].mxu0 %v1082
    %v1084 = vpop.f32.mrb[0].mxu0
    %v1085 = vadd.f32 %v1003, %v1084
    %v1086 = vpop.f32.mrb[0].mxu0
    %1087 = vdwg.mxu0
    %v1088 = vand.u32 %v59, 4294901760
    %v1089 = vsub.f32 %v59, %v1088
    %v1090 = vand.u32 %v1089, 4294901760
    %v1091 = vsub.f32 %v1089, %v1090
    %v1092 = vand.u32 %v1091, 4294901760
    %1093 = vmatprep.subr.mxu0 %v1092
    %v1094 = vand.u32 %v58, 4294901760
    %v1095 = vsub.f32 %v58, %v1094
    %v1096 = vand.u32 %v1095, 4294901760
    %v1097 = vsub.f32 %v1095, %v1096
    %v1098 = vand.u32 %v1097, 4294901760
    %1099 = vmatpush1.xpose.msra.mxu0 %v1098
    %1100 = vmatprep.subr.mxu0 0.0
    %1101 = vmatpush1.xpose.msra.mxu0 0.0
    %1102 = vmatprep.subr.mxu0 0.0
    %1103 = vmatpush1.xpose.msra.mxu0 0.0
    %1104 = vmatprep.subr.mxu0 0.0
    %1105 = vmatpush1.xpose.msra.mxu0 0.0
    %1106 = vmatprep.subr.mxu0 0.0
    %1107 = vmatpush1.xpose.msra.mxu0 0.0
    %1108 = vmatprep.subr.mxu0 0.0
    %1109 = vmatpush1.xpose.msra.mxu0 0.0
    %1110 = vmatprep.subr.mxu0 0.0
    %1111 = vmatpush1.xpose.msra.mxu0 0.0
    %1112 = vmatprep.subr.mxu0 0.0
    %1113 = vmatpush1.xpose.msra.mxu0 0.0
    %1114 = vmatprep.subr.mxu0 0.0
    %1115 = vmatpush1.xpose.msra.mxu0 0.0
    %1116 = vmatprep.subr.mxu0 0.0
    %1117 = vmatpush1.xpose.msra.mxu0 0.0
    %1118 = vmatprep.subr.mxu0 0.0
    %1119 = vmatpush1.xpose.msra.mxu0 0.0
    %1120 = vmatprep.subr.mxu0 0.0
    %1121 = vmatpush1.xpose.msra.mxu0 0.0
    %1122 = vmatprep.subr.mxu0 0.0
    %1123 = vmatpush1.xpose.msra.mxu0 0.0
    %1124 = vmatprep.subr.mxu0 0.0
    %1125 = vmatpush1.xpose.msra.mxu0 0.0
    %1126 = vmatprep.subr.mxu0 0.0
    %1127 = vmatpush1.xpose.msra.mxu0 0.0
    %1128 = vmatprep.subr.mxu0 0.0
    %1129 = vmatpush1.xpose.msra.mxu0 0.0
    %1130 = vmatprep.subr.mxu0 0.0
    %1131 = vmatpush1.xpose.msra.mxu0 0.0
    %1132 = vmatprep.subr.mxu0 0.0
    %1133 = vmatpush1.xpose.msra.mxu0 0.0
    %1134 = vmatprep.subr.mxu0 0.0
    %1135 = vmatpush1.xpose.msra.mxu0 0.0
    %1136 = vmatprep.subr.mxu0 0.0
    %1137 = vmatpush1.xpose.msra.mxu0 0.0
    %1138 = vmatprep.subr.mxu0 0.0
    %1139 = vmatpush1.xpose.msra.mxu0 0.0
    %1140 = vmatprep.subr.mxu0 0.0
    %1141 = vmatpush1.xpose.msra.mxu0 0.0
    %1142 = vmatprep.subr.mxu0 0.0
    %1143 = vmatpush1.xpose.msra.mxu0 0.0
    %1144 = vmatprep.subr.mxu0 0.0
    %1145 = vmatpush1.xpose.msra.mxu0 0.0
    %1146 = vmatprep.subr.mxu0 0.0
    %1147 = vmatpush1.xpose.msra.mxu0 0.0
    %1148 = vmatprep.subr.mxu0 0.0
    %1149 = vmatpush1.xpose.msra.mxu0 0.0
    %1150 = vmatprep.subr.mxu0 0.0
    %1151 = vmatpush1.xpose.msra.mxu0 0.0
    %1152 = vmatprep.subr.mxu0 0.0
    %1153 = vmatpush1.xpose.msra.mxu0 0.0
    %1154 = vmatprep.subr.mxu0 0.0
    %1155 = vmatpush1.xpose.msra.mxu0 0.0
    %1156 = vmatprep.subr.mxu0 0.0
    %1157 = vmatpush1.xpose.msra.mxu0 0.0
    %1158 = vmatprep.subr.mxu0 0.0
    %1159 = vmatpush1.xpose.msra.mxu0 0.0
    %1160 = vmatprep.subr.mxu0 0.0
    %1161 = vmatpush1.xpose.msra.mxu0 0.0
    %v1162 = vand.u32 %v51, 4294901760
    %1163 = vmatprep.mubr.f32.mxu0 %v1162
    %v1164 = vand.u32 %v50, 4294901760
    %1165 = vmatmul.mubr.f32.gmra.mrb[0].mxu0 %v1164
    %v1166 = vpop.f32.mrb[0].mxu0
    %v1167 = vadd.f32 %v1085, %v1166
    %v1168 = vpop.f32.mrb[0].mxu0
    %1169 = vdwg.mxu0
    %v1170 = vand.u32 %v59, 4294901760
    %v1171 = vsub.f32 %v59, %v1170
    %1172 = vmatprep.subr.mxu0 %v1171
    %v1173 = vand.u32 %v58, 4294901760
    %v1174 = vsub.f32 %v58, %v1173
    %1175 = vmatpush1.xpose.msra.mxu0 %v1174
    %1176 = vmatprep.subr.mxu0 0.0
    %1177 = vmatpush1.xpose.msra.mxu0 0.0
    %1178 = vmatprep.subr.mxu0 0.0
    %1179 = vmatpush1.xpose.msra.mxu0 0.0
    %1180 = vmatprep.subr.mxu0 0.0
    %1181 = vmatpush1.xpose.msra.mxu0 0.0
    %1182 = vmatprep.subr.mxu0 0.0
    %1183 = vmatpush1.xpose.msra.mxu0 0.0
    %1184 = vmatprep.subr.mxu0 0.0
    %1185 = vmatpush1.xpose.msra.mxu0 0.0
    %1186 = vmatprep.subr.mxu0 0.0
    %1187 = vmatpush1.xpose.msra.mxu0 0.0
    %1188 = vmatprep.subr.mxu0 0.0
    %1189 = vmatpush1.xpose.msra.mxu0 0.0
    %1190 = vmatprep.subr.mxu0 0.0
    %1191 = vmatpush1.xpose.msra.mxu0 0.0
    %1192 = vmatprep.subr.mxu0 0.0
    %1193 = vmatpush1.xpose.msra.mxu0 0.0
    %1194 = vmatprep.subr.mxu0 0.0
    %1195 = vmatpush1.xpose.msra.mxu0 0.0
    %1196 = vmatprep.subr.mxu0 0.0
    %1197 = vmatpush1.xpose.msra.mxu0 0.0
    %1198 = vmatprep.subr.mxu0 0.0
    %1199 = vmatpush1.xpose.msra.mxu0 0.0
    %1200 = vmatprep.subr.mxu0 0.0
    %1201 = vmatpush1.xpose.msra.mxu0 0.0
    %1202 = vmatprep.subr.mxu0 0.0
    %1203 = vmatpush1.xpose.msra.mxu0 0.0
    %1204 = vmatprep.subr.mxu0 0.0
    %1205 = vmatpush1.xpose.msra.mxu0 0.0
    %1206 = vmatprep.subr.mxu0 0.0
    %1207 = vmatpush1.xpose.msra.mxu0 0.0
    %1208 = vmatprep.subr.mxu0 0.0
    %1209 = vmatpush1.xpose.msra.mxu0 0.0
    %1210 = vmatprep.subr.mxu0 0.0
    %1211 = vmatpush1.xpose.msra.mxu0 0.0
    %1212 = vmatprep.subr.mxu0 0.0
    %1213 = vmatpush1.xpose.msra.mxu0 0.0
    %1214 = vmatprep.subr.mxu0 0.0
    %1215 = vmatpush1.xpose.msra.mxu0 0.0
    %1216 = vmatprep.subr.mxu0 0.0
    %1217 = vmatpush1.xpose.msra.mxu0 0.0
    %1218 = vmatprep.subr.mxu0 0.0
    %1219 = vmatpush1.xpose.msra.mxu0 0.0
    %1220 = vmatprep.subr.mxu0 0.0
    %1221 = vmatpush1.xpose.msra.mxu0 0.0
    %1222 = vmatprep.subr.mxu0 0.0
    %1223 = vmatpush1.xpose.msra.mxu0 0.0
    %1224 = vmatprep.subr.mxu0 0.0
    %1225 = vmatpush1.xpose.msra.mxu0 0.0
    %1226 = vmatprep.subr.mxu0 0.0
    %1227 = vmatpush1.xpose.msra.mxu0 0.0
    %1228 = vmatprep.subr.mxu0 0.0
    %1229 = vmatpush1.xpose.msra.mxu0 0.0
    %1230 = vmatprep.subr.mxu0 0.0
    %1231 = vmatpush1.xpose.msra.mxu0 0.0
    %1232 = vmatprep.subr.mxu0 0.0
    %1233 = vmatpush1.xpose.msra.mxu0 0.0
    %1234 = vmatprep.subr.mxu0 0.0
    %1235 = vmatpush1.xpose.msra.mxu0 0.0
    %1236 = vmatprep.subr.mxu0 0.0
    %1237 = vmatpush1.xpose.msra.mxu0 0.0
    %v1238 = vand.u32 %v51, 4294901760
    %v1239 = vsub.f32 %v51, %v1238
    %1240 = vmatprep.mubr.f32.mxu0 %v1239
    %v1241 = vand.u32 %v50, 4294901760
    %v1242 = vsub.f32 %v50, %v1241
    %1243 = vmatmul.mubr.f32.gmra.mrb[0].mxu0 %v1242
    %v1244 = vpop.f32.mrb[0].mxu0
    %v1245 = vadd.f32 %v1167, %v1244
    %v1246 = vpop.f32.mrb[0].mxu0
    %1247 = vdwg.mxu0
    %v1248 = vand.u32 %v59, 4294901760
    %1249 = vmatprep.subr.mxu0 %v1248
    %v1250 = vand.u32 %v58, 4294901760
    %1251 = vmatpush1.xpose.msra.mxu0 %v1250
    %1252 = vmatprep.subr.mxu0 0.0
    %1253 = vmatpush1.xpose.msra.mxu0 0.0
    %1254 = vmatprep.subr.mxu0 0.0
    %1255 = vmatpush1.xpose.msra.mxu0 0.0
    %1256 = vmatprep.subr.mxu0 0.0
    %1257 = vmatpush1.xpose.msra.mxu0 0.0
    %1258 = vmatprep.subr.mxu0 0.0
    %1259 = vmatpush1.xpose.msra.mxu0 0.0
    %1260 = vmatprep.subr.mxu0 0.0
    %1261 = vmatpush1.xpose.msra.mxu0 0.0
    %1262 = vmatprep.subr.mxu0 0.0
    %1263 = vmatpush1.xpose.msra.mxu0 0.0
    %1264 = vmatprep.subr.mxu0 0.0
    %1265 = vmatpush1.xpose.msra.mxu0 0.0
    %1266 = vmatprep.subr.mxu0 0.0
    %1267 = vmatpush1.xpose.msra.mxu0 0.0
    %1268 = vmatprep.subr.mxu0 0.0
    %1269 = vmatpush1.xpose.msra.mxu0 0.0
    %1270 = vmatprep.subr.mxu0 0.0
    %1271 = vmatpush1.xpose.msra.mxu0 0.0
    %1272 = vmatprep.subr.mxu0 0.0
    %1273 = vmatpush1.xpose.msra.mxu0 0.0
    %1274 = vmatprep.subr.mxu0 0.0
    %1275 = vmatpush1.xpose.msra.mxu0 0.0
    %1276 = vmatprep.subr.mxu0 0.0
    %1277 = vmatpush1.xpose.msra.mxu0 0.0
    %1278 = vmatprep.subr.mxu0 0.0
    %1279 = vmatpush1.xpose.msra.mxu0 0.0
    %1280 = vmatprep.subr.mxu0 0.0
    %1281 = vmatpush1.xpose.msra.mxu0 0.0
    %1282 = vmatprep.subr.mxu0 0.0
    %1283 = vmatpush1.xpose.msra.mxu0 0.0
    %1284 = vmatprep.subr.mxu0 0.0
    %1285 = vmatpush1.xpose.msra.mxu0 0.0
    %1286 = vmatprep.subr.mxu0 0.0
    %1287 = vmatpush1.xpose.msra.mxu0 0.0
    %1288 = vmatprep.subr.mxu0 0.0
    %1289 = vmatpush1.xpose.msra.mxu0 0.0
    %1290 = vmatprep.subr.mxu0 0.0
    %1291 = vmatpush1.xpose.msra.mxu0 0.0
    %1292 = vmatprep.subr.mxu0 0.0
    %1293 = vmatpush1.xpose.msra.mxu0 0.0
    %1294 = vmatprep.subr.mxu0 0.0
    %1295 = vmatpush1.xpose.msra.mxu0 0.0
    %1296 = vmatprep.subr.mxu0 0.0
    %1297 = vmatpush1.xpose.msra.mxu0 0.0
    %1298 = vmatprep.subr.mxu0 0.0
    %1299 = vmatpush1.xpose.msra.mxu0 0.0
    %1300 = vmatprep.subr.mxu0 0.0
    %1301 = vmatpush1.xpose.msra.mxu0 0.0
    %1302 = vmatprep.subr.mxu0 0.0
    %1303 = vmatpush1.xpose.msra.mxu0 0.0
    %1304 = vmatprep.subr.mxu0 0.0
    %1305 = vmatpush1.xpose.msra.mxu0 0.0
    %1306 = vmatprep.subr.mxu0 0.0
    %1307 = vmatpush1.xpose.msra.mxu0 0.0
    %1308 = vmatprep.subr.mxu0 0.0
    %1309 = vmatpush1.xpose.msra.mxu0 0.0
    %1310 = vmatprep.subr.mxu0 0.0
    %1311 = vmatpush1.xpose.msra.mxu0 0.0
    %1312 = vmatprep.subr.mxu0 0.0
    %1313 = vmatpush1.xpose.msra.mxu0 0.0
    %v1314 = vand.u32 %v51, 4294901760
    %v1315 = vsub.f32 %v51, %v1314
    %v1316 = vand.u32 %v1315, 4294901760
    %1317 = vmatprep.mubr.f32.mxu0 %v1316
    %v1318 = vand.u32 %v50, 4294901760
    %v1319 = vsub.f32 %v50, %v1318
    %v1320 = vand.u32 %v1319, 4294901760
    %1321 = vmatmul.mubr.f32.gmra.mrb[0].mxu0 %v1320
    %v1322 = vpop.f32.mrb[0].mxu0
    %v1323 = vadd.f32 %v1245, %v1322
    %v1324 = vpop.f32.mrb[0].mxu0
    %1325 = vdwg.mxu0
    %v1326 = vand.u32 %v59, 4294901760
    %v1327 = vsub.f32 %v59, %v1326
    %v1328 = vand.u32 %v1327, 4294901760
    %1329 = vmatprep.subr.mxu0 %v1328
    %v1330 = vand.u32 %v58, 4294901760
    %v1331 = vsub.f32 %v58, %v1330
    %v1332 = vand.u32 %v1331, 4294901760
    %1333 = vmatpush1.xpose.msra.mxu0 %v1332
    %1334 = vmatprep.subr.mxu0 0.0
    %1335 = vmatpush1.xpose.msra.mxu0 0.0
    %1336 = vmatprep.subr.mxu0 0.0
    %1337 = vmatpush1.xpose.msra.mxu0 0.0
    %1338 = vmatprep.subr.mxu0 0.0
    %1339 = vmatpush1.xpose.msra.mxu0 0.0
    %1340 = vmatprep.subr.mxu0 0.0
    %1341 = vmatpush1.xpose.msra.mxu0 0.0
    %1342 = vmatprep.subr.mxu0 0.0
    %1343 = vmatpush1.xpose.msra.mxu0 0.0
    %1344 = vmatprep.subr.mxu0 0.0
    %1345 = vmatpush1.xpose.msra.mxu0 0.0
    %1346 = vmatprep.subr.mxu0 0.0
    %1347 = vmatpush1.xpose.msra.mxu0 0.0
    %1348 = vmatprep.subr.mxu0 0.0
    %1349 = vmatpush1.xpose.msra.mxu0 0.0
    %1350 = vmatprep.subr.mxu0 0.0
    %1351 = vmatpush1.xpose.msra.mxu0 0.0
    %1352 = vmatprep.subr.mxu0 0.0
    %1353 = vmatpush1.xpose.msra.mxu0 0.0
    %1354 = vmatprep.subr.mxu0 0.0
    %1355 = vmatpush1.xpose.msra.mxu0 0.0
    %1356 = vmatprep.subr.mxu0 0.0
    %1357 = vmatpush1.xpose.msra.mxu0 0.0
    %1358 = vmatprep.subr.mxu0 0.0
    %1359 = vmatpush1.xpose.msra.mxu0 0.0
    %1360 = vmatprep.subr.mxu0 0.0
    %1361 = vmatpush1.xpose.msra.mxu0 0.0
    %1362 = vmatprep.subr.mxu0 0.0
    %1363 = vmatpush1.xpose.msra.mxu0 0.0
    %1364 = vmatprep.subr.mxu0 0.0
    %1365 = vmatpush1.xpose.msra.mxu0 0.0
    %1366 = vmatprep.subr.mxu0 0.0
    %1367 = vmatpush1.xpose.msra.mxu0 0.0
    %1368 = vmatprep.subr.mxu0 0.0
    %1369 = vmatpush1.xpose.msra.mxu0 0.0
    %1370 = vmatprep.subr.mxu0 0.0
    %1371 = vmatpush1.xpose.msra.mxu0 0.0
    %1372 = vmatprep.subr.mxu0 0.0
    %1373 = vmatpush1.xpose.msra.mxu0 0.0
    %1374 = vmatprep.subr.mxu0 0.0
    %1375 = vmatpush1.xpose.msra.mxu0 0.0
    %1376 = vmatprep.subr.mxu0 0.0
    %1377 = vmatpush1.xpose.msra.mxu0 0.0
    %1378 = vmatprep.subr.mxu0 0.0
    %1379 = vmatpush1.xpose.msra.mxu0 0.0
    %1380 = vmatprep.subr.mxu0 0.0
    %1381 = vmatpush1.xpose.msra.mxu0 0.0
    %1382 = vmatprep.subr.mxu0 0.0
    %1383 = vmatpush1.xpose.msra.mxu0 0.0
    %1384 = vmatprep.subr.mxu0 0.0
    %1385 = vmatpush1.xpose.msra.mxu0 0.0
    %1386 = vmatprep.subr.mxu0 0.0
    %1387 = vmatpush1.xpose.msra.mxu0 0.0
    %1388 = vmatprep.subr.mxu0 0.0
    %1389 = vmatpush1.xpose.msra.mxu0 0.0
    %1390 = vmatprep.subr.mxu0 0.0
    %1391 = vmatpush1.xpose.msra.mxu0 0.0
    %1392 = vmatprep.subr.mxu0 0.0
    %1393 = vmatpush1.xpose.msra.mxu0 0.0
    %1394 = vmatprep.subr.mxu0 0.0
    %1395 = vmatpush1.xpose.msra.mxu0 0.0
    %v1396 = vand.u32 %v51, 4294901760
    %1397 = vmatprep.mubr.f32.mxu0 %v1396
    %v1398 = vand.u32 %v50, 4294901760
    %1399 = vmatmul.mubr.f32.gmra.mrb[0].mxu0 %v1398
    %v1400 = vpop.f32.mrb[0].mxu0
    %v1401 = vadd.f32 %v1323, %v1400
    %v1402 = vpop.f32.mrb[0].mxu0
    %1403 = vdwg.mxu0
    %v1404 = vand.u32 %v59, 4294901760
    %1405 = vmatprep.subr.mxu0 %v1404
    %v1406 = vand.u32 %v58, 4294901760
    %1407 = vmatpush1.xpose.msra.mxu0 %v1406
    %1408 = vmatprep.subr.mxu0 0.0
    %1409 = vmatpush1.xpose.msra.mxu0 0.0
    %1410 = vmatprep.subr.mxu0 0.0
    %1411 = vmatpush1.xpose.msra.mxu0 0.0
    %1412 = vmatprep.subr.mxu0 0.0
    %1413 = vmatpush1.xpose.msra.mxu0 0.0
    %1414 = vmatprep.subr.mxu0 0.0
    %1415 = vmatpush1.xpose.msra.mxu0 0.0
    %1416 = vmatprep.subr.mxu0 0.0
    %1417 = vmatpush1.xpose.msra.mxu0 0.0
    %1418 = vmatprep.subr.mxu0 0.0
    %1419 = vmatpush1.xpose.msra.mxu0 0.0
    %1420 = vmatprep.subr.mxu0 0.0
    %1421 = vmatpush1.xpose.msra.mxu0 0.0
    %1422 = vmatprep.subr.mxu0 0.0
    %1423 = vmatpush1.xpose.msra.mxu0 0.0
    %1424 = vmatprep.subr.mxu0 0.0
    %1425 = vmatpush1.xpose.msra.mxu0 0.0
    %1426 = vmatprep.subr.mxu0 0.0
    %1427 = vmatpush1.xpose.msra.mxu0 0.0
    %1428 = vmatprep.subr.mxu0 0.0
    %1429 = vmatpush1.xpose.msra.mxu0 0.0
    %1430 = vmatprep.subr.mxu0 0.0
    %1431 = vmatpush1.xpose.msra.mxu0 0.0
    %1432 = vmatprep.subr.mxu0 0.0
    %1433 = vmatpush1.xpose.msra.mxu0 0.0
    %1434 = vmatprep.subr.mxu0 0.0
    %1435 = vmatpush1.xpose.msra.mxu0 0.0
    %1436 = vmatprep.subr.mxu0 0.0
    %1437 = vmatpush1.xpose.msra.mxu0 0.0
    %1438 = vmatprep.subr.mxu0 0.0
    %1439 = vmatpush1.xpose.msra.mxu0 0.0
    %1440 = vmatprep.subr.mxu0 0.0
    %1441 = vmatpush1.xpose.msra.mxu0 0.0
    %1442 = vmatprep.subr.mxu0 0.0
    %1443 = vmatpush1.xpose.msra.mxu0 0.0
    %1444 = vmatprep.subr.mxu0 0.0
    %1445 = vmatpush1.xpose.msra.mxu0 0.0
    %1446 = vmatprep.subr.mxu0 0.0
    %1447 = vmatpush1.xpose.msra.mxu0 0.0
    %1448 = vmatprep.subr.mxu0 0.0
    %1449 = vmatpush1.xpose.msra.mxu0 0.0
    %1450 = vmatprep.subr.mxu0 0.0
    %1451 = vmatpush1.xpose.msra.mxu0 0.0
    %1452 = vmatprep.subr.mxu0 0.0
    %1453 = vmatpush1.xpose.msra.mxu0 0.0
    %1454 = vmatprep.subr.mxu0 0.0
    %1455 = vmatpush1.xpose.msra.mxu0 0.0
    %1456 = vmatprep.subr.mxu0 0.0
    %1457 = vmatpush1.xpose.msra.mxu0 0.0
    %1458 = vmatprep.subr.mxu0 0.0
    %1459 = vmatpush1.xpose.msra.mxu0 0.0
    %1460 = vmatprep.subr.mxu0 0.0
    %1461 = vmatpush1.xpose.msra.mxu0 0.0
    %1462 = vmatprep.subr.mxu0 0.0
    %1463 = vmatpush1.xpose.msra.mxu0 0.0
    %1464 = vmatprep.subr.mxu0 0.0
    %1465 = vmatpush1.xpose.msra.mxu0 0.0
    %1466 = vmatprep.subr.mxu0 0.0
    %1467 = vmatpush1.xpose.msra.mxu0 0.0
    %1468 = vmatprep.subr.mxu0 0.0
    %1469 = vmatpush1.xpose.msra.mxu0 0.0
    %v1470 = vand.u32 %v51, 4294901760
    %1471 = vmatprep.mubr.f32.mxu0 %v1470
    %v1472 = vand.u32 %v50, 4294901760
    %1473 = vmatmul.mubr.f32.gmra.mrb[0].mxu0 %v1472
    %v1474 = vpop.f32.mrb[0].mxu0
    %v1475 = vadd.f32 %v1401, %v1474
    %v1476 = vpop.f32.mrb[0].mxu0
    %1477 = vdwg.mxu0
    %v1478 = vand.u32 %v61, 4294901760
    %1479 = vmatprep.subr.mxu0 %v1478
    %v1480 = vand.u32 %v60, 4294901760
    %1481 = vmatpush1.xpose.msra.mxu0 %v1480
    %1482 = vmatprep.subr.mxu0 0.0
    %1483 = vmatpush1.xpose.msra.mxu0 0.0
    %1484 = vmatprep.subr.mxu0 0.0
    %1485 = vmatpush1.xpose.msra.mxu0 0.0
    %1486 = vmatprep.subr.mxu0 0.0
    %1487 = vmatpush1.xpose.msra.mxu0 0.0
    %1488 = vmatprep.subr.mxu0 0.0
    %1489 = vmatpush1.xpose.msra.mxu0 0.0
    %1490 = vmatprep.subr.mxu0 0.0
    %1491 = vmatpush1.xpose.msra.mxu0 0.0
    %1492 = vmatprep.subr.mxu0 0.0
    %1493 = vmatpush1.xpose.msra.mxu0 0.0
    %1494 = vmatprep.subr.mxu0 0.0
    %1495 = vmatpush1.xpose.msra.mxu0 0.0
    %1496 = vmatprep.subr.mxu0 0.0
    %1497 = vmatpush1.xpose.msra.mxu0 0.0
    %1498 = vmatprep.subr.mxu0 0.0
    %1499 = vmatpush1.xpose.msra.mxu0 0.0
    %1500 = vmatprep.subr.mxu0 0.0
    %1501 = vmatpush1.xpose.msra.mxu0 0.0
    %1502 = vmatprep.subr.mxu0 0.0
    %1503 = vmatpush1.xpose.msra.mxu0 0.0
    %1504 = vmatprep.subr.mxu0 0.0
    %1505 = vmatpush1.xpose.msra.mxu0 0.0
    %1506 = vmatprep.subr.mxu0 0.0
    %1507 = vmatpush1.xpose.msra.mxu0 0.0
    %1508 = vmatprep.subr.mxu0 0.0
    %1509 = vmatpush1.xpose.msra.mxu0 0.0
    %1510 = vmatprep.subr.mxu0 0.0
    %1511 = vmatpush1.xpose.msra.mxu0 0.0
    %1512 = vmatprep.subr.mxu0 0.0
    %1513 = vmatpush1.xpose.msra.mxu0 0.0
    %1514 = vmatprep.subr.mxu0 0.0
    %1515 = vmatpush1.xpose.msra.mxu0 0.0
    %1516 = vmatprep.subr.mxu0 0.0
    %1517 = vmatpush1.xpose.msra.mxu0 0.0
    %1518 = vmatprep.subr.mxu0 0.0
    %1519 = vmatpush1.xpose.msra.mxu0 0.0
    %1520 = vmatprep.subr.mxu0 0.0
    %1521 = vmatpush1.xpose.msra.mxu0 0.0
    %1522 = vmatprep.subr.mxu0 0.0
    %1523 = vmatpush1.xpose.msra.mxu0 0.0
    %1524 = vmatprep.subr.mxu0 0.0
    %1525 = vmatpush1.xpose.msra.mxu0 0.0
    %1526 = vmatprep.subr.mxu0 0.0
    %1527 = vmatpush1.xpose.msra.mxu0 0.0
    %1528 = vmatprep.subr.mxu0 0.0
    %1529 = vmatpush1.xpose.msra.mxu0 0.0
    %1530 = vmatprep.subr.mxu0 0.0
    %1531 = vmatpush1.xpose.msra.mxu0 0.0
    %1532 = vmatprep.subr.mxu0 0.0
    %1533 = vmatpush1.xpose.msra.mxu0 0.0
    %1534 = vmatprep.subr.mxu0 0.0
    %1535 = vmatpush1.xpose.msra.mxu0 0.0
    %1536 = vmatprep.subr.mxu0 0.0
    %1537 = vmatpush1.xpose.msra.mxu0 0.0
    %1538 = vmatprep.subr.mxu0 0.0
    %1539 = vmatpush1.xpose.msra.mxu0 0.0
    %1540 = vmatprep.subr.mxu0 0.0
    %1541 = vmatpush1.xpose.msra.mxu0 0.0
    %1542 = vmatprep.subr.mxu0 0.0
    %1543 = vmatpush1.xpose.msra.mxu0 0.0
    %v1544 = vand.u32 %v53, 4294901760
    %v1545 = vsub.f32 %v53, %v1544
    %v1546 = vand.u32 %v1545, 4294901760
    %v1547 = vsub.f32 %v1545, %v1546
    %v1548 = vand.u32 %v1547, 4294901760
    %1549 = vmatprep.mubr.f32.mxu0 %v1548
    %v1550 = vand.u32 %v52, 4294901760
    %v1551 = vsub.f32 %v52, %v1550
    %v1552 = vand.u32 %v1551, 4294901760
    %v1553 = vsub.f32 %v1551, %v1552
    %v1554 = vand.u32 %v1553, 4294901760
    %1555 = vmatmul.mubr.f32.gmra.mrb[0].mxu0 %v1554
    %v1556 = vpop.f32.mrb[0].mxu0
    %v1557 = vadd.f32 %v1475, %v1556
    %v1558 = vpop.f32.mrb[0].mxu0
    %1559 = vdwg.mxu0
    %v1560 = vand.u32 %v61, 4294901760
    %v1561 = vsub.f32 %v61, %v1560
    %v1562 = vand.u32 %v1561, 4294901760
    %v1563 = vsub.f32 %v1561, %v1562
    %v1564 = vand.u32 %v1563, 4294901760
    %1565 = vmatprep.subr.mxu0 %v1564
    %v1566 = vand.u32 %v60, 4294901760
    %v1567 = vsub.f32 %v60, %v1566
    %v1568 = vand.u32 %v1567, 4294901760
    %v1569 = vsub.f32 %v1567, %v1568
    %v1570 = vand.u32 %v1569, 4294901760
    %1571 = vmatpush1.xpose.msra.mxu0 %v1570
    %1572 = vmatprep.subr.mxu0 0.0
    %1573 = vmatpush1.xpose.msra.mxu0 0.0
    %1574 = vmatprep.subr.mxu0 0.0
    %1575 = vmatpush1.xpose.msra.mxu0 0.0
    %1576 = vmatprep.subr.mxu0 0.0
    %1577 = vmatpush1.xpose.msra.mxu0 0.0
    %1578 = vmatprep.subr.mxu0 0.0
    %1579 = vmatpush1.xpose.msra.mxu0 0.0
    %1580 = vmatprep.subr.mxu0 0.0
    %1581 = vmatpush1.xpose.msra.mxu0 0.0
    %1582 = vmatprep.subr.mxu0 0.0
    %1583 = vmatpush1.xpose.msra.mxu0 0.0
    %1584 = vmatprep.subr.mxu0 0.0
    %1585 = vmatpush1.xpose.msra.mxu0 0.0
    %1586 = vmatprep.subr.mxu0 0.0
    %1587 = vmatpush1.xpose.msra.mxu0 0.0
    %1588 = vmatprep.subr.mxu0 0.0
    %1589 = vmatpush1.xpose.msra.mxu0 0.0
    %1590 = vmatprep.subr.mxu0 0.0
    %1591 = vmatpush1.xpose.msra.mxu0 0.0
    %1592 = vmatprep.subr.mxu0 0.0
    %1593 = vmatpush1.xpose.msra.mxu0 0.0
    %1594 = vmatprep.subr.mxu0 0.0
    %1595 = vmatpush1.xpose.msra.mxu0 0.0
    %1596 = vmatprep.subr.mxu0 0.0
    %1597 = vmatpush1.xpose.msra.mxu0 0.0
    %1598 = vmatprep.subr.mxu0 0.0
    %1599 = vmatpush1.xpose.msra.mxu0 0.0
    %1600 = vmatprep.subr.mxu0 0.0
    %1601 = vmatpush1.xpose.msra.mxu0 0.0
    %1602 = vmatprep.subr.mxu0 0.0
    %1603 = vmatpush1.xpose.msra.mxu0 0.0
    %1604 = vmatprep.subr.mxu0 0.0
    %1605 = vmatpush1.xpose.msra.mxu0 0.0
    %1606 = vmatprep.subr.mxu0 0.0
    %1607 = vmatpush1.xpose.msra.mxu0 0.0
    %1608 = vmatprep.subr.mxu0 0.0
    %1609 = vmatpush1.xpose.msra.mxu0 0.0
    %1610 = vmatprep.subr.mxu0 0.0
    %1611 = vmatpush1.xpose.msra.mxu0 0.0
    %1612 = vmatprep.subr.mxu0 0.0
    %1613 = vmatpush1.xpose.msra.mxu0 0.0
    %1614 = vmatprep.subr.mxu0 0.0
    %1615 = vmatpush1.xpose.msra.mxu0 0.0
    %1616 = vmatprep.subr.mxu0 0.0
    %1617 = vmatpush1.xpose.msra.mxu0 0.0
    %1618 = vmatprep.subr.mxu0 0.0
    %1619 = vmatpush1.xpose.msra.mxu0 0.0
    %1620 = vmatprep.subr.mxu0 0.0
    %1621 = vmatpush1.xpose.msra.mxu0 0.0
    %1622 = vmatprep.subr.mxu0 0.0
    %1623 = vmatpush1.xpose.msra.mxu0 0.0
    %1624 = vmatprep.subr.mxu0 0.0
    %1625 = vmatpush1.xpose.msra.mxu0 0.0
    %1626 = vmatprep.subr.mxu0 0.0
    %1627 = vmatpush1.xpose.msra.mxu0 0.0
    %1628 = vmatprep.subr.mxu0 0.0
    %1629 = vmatpush1.xpose.msra.mxu0 0.0
    %1630 = vmatprep.subr.mxu0 0.0
    %1631 = vmatpush1.xpose.msra.mxu0 0.0
    %1632 = vmatprep.subr.mxu0 0.0
    %1633 = vmatpush1.xpose.msra.mxu0 0.0
    %v1634 = vand.u32 %v53, 4294901760
    %1635 = vmatprep.mubr.f32.mxu0 %v1634
    %v1636 = vand.u32 %v52, 4294901760
    %1637 = vmatmul.mubr.f32.gmra.mrb[0].mxu0 %v1636
    %v1638 = vpop.f32.mrb[0].mxu0
    %v1639 = vadd.f32 %v1557, %v1638
    %v1640 = vpop.f32.mrb[0].mxu0
    %1641 = vdwg.mxu0
    %v1642 = vand.u32 %v61, 4294901760
    %v1643 = vsub.f32 %v61, %v1642
    %1644 = vmatprep.subr.mxu0 %v1643
    %v1645 = vand.u32 %v60, 4294901760
    %v1646 = vsub.f32 %v60, %v1645
    %1647 = vmatpush1.xpose.msra.mxu0 %v1646
    %1648 = vmatprep.subr.mxu0 0.0
    %1649 = vmatpush1.xpose.msra.mxu0 0.0
    %1650 = vmatprep.subr.mxu0 0.0
    %1651 = vmatpush1.xpose.msra.mxu0 0.0
    %1652 = vmatprep.subr.mxu0 0.0
    %1653 = vmatpush1.xpose.msra.mxu0 0.0
    %1654 = vmatprep.subr.mxu0 0.0
    %1655 = vmatpush1.xpose.msra.mxu0 0.0
    %1656 = vmatprep.subr.mxu0 0.0
    %1657 = vmatpush1.xpose.msra.mxu0 0.0
    %1658 = vmatprep.subr.mxu0 0.0
    %1659 = vmatpush1.xpose.msra.mxu0 0.0
    %1660 = vmatprep.subr.mxu0 0.0
    %1661 = vmatpush1.xpose.msra.mxu0 0.0
    %1662 = vmatprep.subr.mxu0 0.0
    %1663 = vmatpush1.xpose.msra.mxu0 0.0
    %1664 = vmatprep.subr.mxu0 0.0
    %1665 = vmatpush1.xpose.msra.mxu0 0.0
    %1666 = vmatprep.subr.mxu0 0.0
    %1667 = vmatpush1.xpose.msra.mxu0 0.0
    %1668 = vmatprep.subr.mxu0 0.0
    %1669 = vmatpush1.xpose.msra.mxu0 0.0
    %1670 = vmatprep.subr.mxu0 0.0
    %1671 = vmatpush1.xpose.msra.mxu0 0.0
    %1672 = vmatprep.subr.mxu0 0.0
    %1673 = vmatpush1.xpose.msra.mxu0 0.0
    %1674 = vmatprep.subr.mxu0 0.0
    %1675 = vmatpush1.xpose.msra.mxu0 0.0
    %1676 = vmatprep.subr.mxu0 0.0
    %1677 = vmatpush1.xpose.msra.mxu0 0.0
    %1678 = vmatprep.subr.mxu0 0.0
    %1679 = vmatpush1.xpose.msra.mxu0 0.0
    %1680 = vmatprep.subr.mxu0 0.0
    %1681 = vmatpush1.xpose.msra.mxu0 0.0
    %1682 = vmatprep.subr.mxu0 0.0
    %1683 = vmatpush1.xpose.msra.mxu0 0.0
    %1684 = vmatprep.subr.mxu0 0.0
    %1685 = vmatpush1.xpose.msra.mxu0 0.0
    %1686 = vmatprep.subr.mxu0 0.0
    %1687 = vmatpush1.xpose.msra.mxu0 0.0
    %1688 = vmatprep.subr.mxu0 0.0
    %1689 = vmatpush1.xpose.msra.mxu0 0.0
    %1690 = vmatprep.subr.mxu0 0.0
    %1691 = vmatpush1.xpose.msra.mxu0 0.0
    %1692 = vmatprep.subr.mxu0 0.0
    %1693 = vmatpush1.xpose.msra.mxu0 0.0
    %1694 = vmatprep.subr.mxu0 0.0
    %1695 = vmatpush1.xpose.msra.mxu0 0.0
    %1696 = vmatprep.subr.mxu0 0.0
    %1697 = vmatpush1.xpose.msra.mxu0 0.0
    %1698 = vmatprep.subr.mxu0 0.0
    %1699 = vmatpush1.xpose.msra.mxu0 0.0
    %1700 = vmatprep.subr.mxu0 0.0
    %1701 = vmatpush1.xpose.msra.mxu0 0.0
    %1702 = vmatprep.subr.mxu0 0.0
    %1703 = vmatpush1.xpose.msra.mxu0 0.0
    %1704 = vmatprep.subr.mxu0 0.0
    %1705 = vmatpush1.xpose.msra.mxu0 0.0
    %1706 = vmatprep.subr.mxu0 0.0
    %1707 = vmatpush1.xpose.msra.mxu0 0.0
    %1708 = vmatprep.subr.mxu0 0.0
    %1709 = vmatpush1.xpose.msra.mxu0 0.0
    %v1710 = vand.u32 %v53, 4294901760
    %v1711 = vsub.f32 %v53, %v1710
    %1712 = vmatprep.mubr.f32.mxu0 %v1711
    %v1713 = vand.u32 %v52, 4294901760
    %v1714 = vsub.f32 %v52, %v1713
    %1715 = vmatmul.mubr.f32.gmra.mrb[0].mxu0 %v1714
    %v1716 = vpop.f32.mrb[0].mxu0
    %v1717 = vadd.f32 %v1639, %v1716
    %v1718 = vpop.f32.mrb[0].mxu0
    %1719 = vdwg.mxu0
    %v1720 = vand.u32 %v61, 4294901760
    %1721 = vmatprep.subr.mxu0 %v1720
    %v1722 = vand.u32 %v60, 4294901760
    %1723 = vmatpush1.xpose.msra.mxu0 %v1722
    %1724 = vmatprep.subr.mxu0 0.0
    %1725 = vmatpush1.xpose.msra.mxu0 0.0
    %1726 = vmatprep.subr.mxu0 0.0
    %1727 = vmatpush1.xpose.msra.mxu0 0.0
    %1728 = vmatprep.subr.mxu0 0.0
    %1729 = vmatpush1.xpose.msra.mxu0 0.0
    %1730 = vmatprep.subr.mxu0 0.0
    %1731 = vmatpush1.xpose.msra.mxu0 0.0
    %1732 = vmatprep.subr.mxu0 0.0
    %1733 = vmatpush1.xpose.msra.mxu0 0.0
    %1734 = vmatprep.subr.mxu0 0.0
    %1735 = vmatpush1.xpose.msra.mxu0 0.0
    %1736 = vmatprep.subr.mxu0 0.0
    %1737 = vmatpush1.xpose.msra.mxu0 0.0
    %1738 = vmatprep.subr.mxu0 0.0
    %1739 = vmatpush1.xpose.msra.mxu0 0.0
    %1740 = vmatprep.subr.mxu0 0.0
    %1741 = vmatpush1.xpose.msra.mxu0 0.0
    %1742 = vmatprep.subr.mxu0 0.0
    %1743 = vmatpush1.xpose.msra.mxu0 0.0
    %1744 = vmatprep.subr.mxu0 0.0
    %1745 = vmatpush1.xpose.msra.mxu0 0.0
    %1746 = vmatprep.subr.mxu0 0.0
    %1747 = vmatpush1.xpose.msra.mxu0 0.0
    %1748 = vmatprep.subr.mxu0 0.0
    %1749 = vmatpush1.xpose.msra.mxu0 0.0
    %1750 = vmatprep.subr.mxu0 0.0
    %1751 = vmatpush1.xpose.msra.mxu0 0.0
    %1752 = vmatprep.subr.mxu0 0.0
    %1753 = vmatpush1.xpose.msra.mxu0 0.0
    %1754 = vmatprep.subr.mxu0 0.0
    %1755 = vmatpush1.xpose.msra.mxu0 0.0
    %1756 = vmatprep.subr.mxu0 0.0
    %1757 = vmatpush1.xpose.msra.mxu0 0.0
    %1758 = vmatprep.subr.mxu0 0.0
    %1759 = vmatpush1.xpose.msra.mxu0 0.0
    %1760 = vmatprep.subr.mxu0 0.0
    %1761 = vmatpush1.xpose.msra.mxu0 0.0
    %1762 = vmatprep.subr.mxu0 0.0
    %1763 = vmatpush1.xpose.msra.mxu0 0.0
    %1764 = vmatprep.subr.mxu0 0.0
    %1765 = vmatpush1.xpose.msra.mxu0 0.0
    %1766 = vmatprep.subr.mxu0 0.0
    %1767 = vmatpush1.xpose.msra.mxu0 0.0
    %1768 = vmatprep.subr.mxu0 0.0
    %1769 = vmatpush1.xpose.msra.mxu0 0.0
    %1770 = vmatprep.subr.mxu0 0.0
    %1771 = vmatpush1.xpose.msra.mxu0 0.0
    %1772 = vmatprep.subr.mxu0 0.0
    %1773 = vmatpush1.xpose.msra.mxu0 0.0
    %1774 = vmatprep.subr.mxu0 0.0
    %1775 = vmatpush1.xpose.msra.mxu0 0.0
    %1776 = vmatprep.subr.mxu0 0.0
    %1777 = vmatpush1.xpose.msra.mxu0 0.0
    %1778 = vmatprep.subr.mxu0 0.0
    %1779 = vmatpush1.xpose.msra.mxu0 0.0
    %1780 = vmatprep.subr.mxu0 0.0
    %1781 = vmatpush1.xpose.msra.mxu0 0.0
    %1782 = vmatprep.subr.mxu0 0.0
    %1783 = vmatpush1.xpose.msra.mxu0 0.0
    %1784 = vmatprep.subr.mxu0 0.0
    %1785 = vmatpush1.xpose.msra.mxu0 0.0
    %v1786 = vand.u32 %v53, 4294901760
    %v1787 = vsub.f32 %v53, %v1786
    %v1788 = vand.u32 %v1787, 4294901760
    %1789 = vmatprep.mubr.f32.mxu0 %v1788
    %v1790 = vand.u32 %v52, 4294901760
    %v1791 = vsub.f32 %v52, %v1790
    %v1792 = vand.u32 %v1791, 4294901760
    %1793 = vmatmul.mubr.f32.gmra.mrb[0].mxu0 %v1792
    %v1794 = vpop.f32.mrb[0].mxu0
    %v1795 = vadd.f32 %v1717, %v1794
    %v1796 = vpop.f32.mrb[0].mxu0
    %1797 = vdwg.mxu0
    %v1798 = vand.u32 %v61, 4294901760
    %v1799 = vsub.f32 %v61, %v1798
    %v1800 = vand.u32 %v1799, 4294901760
    %1801 = vmatprep.subr.mxu0 %v1800
    %v1802 = vand.u32 %v60, 4294901760
    %v1803 = vsub.f32 %v60, %v1802
    %v1804 = vand.u32 %v1803, 4294901760
    %1805 = vmatpush1.xpose.msra.mxu0 %v1804
    %1806 = vmatprep.subr.mxu0 0.0
    %1807 = vmatpush1.xpose.msra.mxu0 0.0
    %1808 = vmatprep.subr.mxu0 0.0
    %1809 = vmatpush1.xpose.msra.mxu0 0.0
    %1810 = vmatprep.subr.mxu0 0.0
    %1811 = vmatpush1.xpose.msra.mxu0 0.0
    %1812 = vmatprep.subr.mxu0 0.0
    %1813 = vmatpush1.xpose.msra.mxu0 0.0
    %1814 = vmatprep.subr.mxu0 0.0
    %1815 = vmatpush1.xpose.msra.mxu0 0.0
    %1816 = vmatprep.subr.mxu0 0.0
    %1817 = vmatpush1.xpose.msra.mxu0 0.0
    %1818 = vmatprep.subr.mxu0 0.0
    %1819 = vmatpush1.xpose.msra.mxu0 0.0
    %1820 = vmatprep.subr.mxu0 0.0
    %1821 = vmatpush1.xpose.msra.mxu0 0.0
    %1822 = vmatprep.subr.mxu0 0.0
    %1823 = vmatpush1.xpose.msra.mxu0 0.0
    %1824 = vmatprep.subr.mxu0 0.0
    %1825 = vmatpush1.xpose.msra.mxu0 0.0
    %1826 = vmatprep.subr.mxu0 0.0
    %1827 = vmatpush1.xpose.msra.mxu0 0.0
    %1828 = vmatprep.subr.mxu0 0.0
    %1829 = vmatpush1.xpose.msra.mxu0 0.0
    %1830 = vmatprep.subr.mxu0 0.0
    %1831 = vmatpush1.xpose.msra.mxu0 0.0
    %1832 = vmatprep.subr.mxu0 0.0
    %1833 = vmatpush1.xpose.msra.mxu0 0.0
    %1834 = vmatprep.subr.mxu0 0.0
    %1835 = vmatpush1.xpose.msra.mxu0 0.0
    %1836 = vmatprep.subr.mxu0 0.0
    %1837 = vmatpush1.xpose.msra.mxu0 0.0
    %1838 = vmatprep.subr.mxu0 0.0
    %1839 = vmatpush1.xpose.msra.mxu0 0.0
    %1840 = vmatprep.subr.mxu0 0.0
    %1841 = vmatpush1.xpose.msra.mxu0 0.0
    %1842 = vmatprep.subr.mxu0 0.0
    %1843 = vmatpush1.xpose.msra.mxu0 0.0
    %1844 = vmatprep.subr.mxu0 0.0
    %1845 = vmatpush1.xpose.msra.mxu0 0.0
    %1846 = vmatprep.subr.mxu0 0.0
    %1847 = vmatpush1.xpose.msra.mxu0 0.0
    %1848 = vmatprep.subr.mxu0 0.0
    %1849 = vmatpush1.xpose.msra.mxu0 0.0
    %1850 = vmatprep.subr.mxu0 0.0
    %1851 = vmatpush1.xpose.msra.mxu0 0.0
    %1852 = vmatprep.subr.mxu0 0.0
    %1853 = vmatpush1.xpose.msra.mxu0 0.0
    %1854 = vmatprep.subr.mxu0 0.0
    %1855 = vmatpush1.xpose.msra.mxu0 0.0
    %1856 = vmatprep.subr.mxu0 0.0
    %1857 = vmatpush1.xpose.msra.mxu0 0.0
    %1858 = vmatprep.subr.mxu0 0.0
    %1859 = vmatpush1.xpose.msra.mxu0 0.0
    %1860 = vmatprep.subr.mxu0 0.0
    %1861 = vmatpush1.xpose.msra.mxu0 0.0
    %1862 = vmatprep.subr.mxu0 0.0
    %1863 = vmatpush1.xpose.msra.mxu0 0.0
    %1864 = vmatprep.subr.mxu0 0.0
    %1865 = vmatpush1.xpose.msra.mxu0 0.0
    %1866 = vmatprep.subr.mxu0 0.0
    %1867 = vmatpush1.xpose.msra.mxu0 0.0
    %v1868 = vand.u32 %v53, 4294901760
    %1869 = vmatprep.mubr.f32.mxu0 %v1868
    %v1870 = vand.u32 %v52, 4294901760
    %1871 = vmatmul.mubr.f32.gmra.mrb[0].mxu0 %v1870
    %v1872 = vpop.f32.mrb[0].mxu0
    %v1873 = vadd.f32 %v1795, %v1872
    %v1874 = vpop.f32.mrb[0].mxu0
    %1875 = vdwg.mxu0
    %v1876 = vand.u32 %v61, 4294901760
    %1877 = vmatprep.subr.mxu0 %v1876
    %v1878 = vand.u32 %v60, 4294901760
    %1879 = vmatpush1.xpose.msra.mxu0 %v1878
    %1880 = vmatprep.subr.mxu0 0.0
    %1881 = vmatpush1.xpose.msra.mxu0 0.0
    %1882 = vmatprep.subr.mxu0 0.0
    %1883 = vmatpush1.xpose.msra.mxu0 0.0
    %1884 = vmatprep.subr.mxu0 0.0
    %1885 = vmatpush1.xpose.msra.mxu0 0.0
    %1886 = vmatprep.subr.mxu0 0.0
    %1887 = vmatpush1.xpose.msra.mxu0 0.0
    %1888 = vmatprep.subr.mxu0 0.0
    %1889 = vmatpush1.xpose.msra.mxu0 0.0
    %1890 = vmatprep.subr.mxu0 0.0
    %1891 = vmatpush1.xpose.msra.mxu0 0.0
    %1892 = vmatprep.subr.mxu0 0.0
    %1893 = vmatpush1.xpose.msra.mxu0 0.0
    %1894 = vmatprep.subr.mxu0 0.0
    %1895 = vmatpush1.xpose.msra.mxu0 0.0
    %1896 = vmatprep.subr.mxu0 0.0
    %1897 = vmatpush1.xpose.msra.mxu0 0.0
    %1898 = vmatprep.subr.mxu0 0.0
    %1899 = vmatpush1.xpose.msra.mxu0 0.0
    %1900 = vmatprep.subr.mxu0 0.0
    %1901 = vmatpush1.xpose.msra.mxu0 0.0
    %1902 = vmatprep.subr.mxu0 0.0
    %1903 = vmatpush1.xpose.msra.mxu0 0.0
    %1904 = vmatprep.subr.mxu0 0.0
    %1905 = vmatpush1.xpose.msra.mxu0 0.0
    %1906 = vmatprep.subr.mxu0 0.0
    %1907 = vmatpush1.xpose.msra.mxu0 0.0
    %1908 = vmatprep.subr.mxu0 0.0
    %1909 = vmatpush1.xpose.msra.mxu0 0.0
    %1910 = vmatprep.subr.mxu0 0.0
    %1911 = vmatpush1.xpose.msra.mxu0 0.0
    %1912 = vmatprep.subr.mxu0 0.0
    %1913 = vmatpush1.xpose.msra.mxu0 0.0
    %1914 = vmatprep.subr.mxu0 0.0
    %1915 = vmatpush1.xpose.msra.mxu0 0.0
    %1916 = vmatprep.subr.mxu0 0.0
    %1917 = vmatpush1.xpose.msra.mxu0 0.0
    %1918 = vmatprep.subr.mxu0 0.0
    %1919 = vmatpush1.xpose.msra.mxu0 0.0
    %1920 = vmatprep.subr.mxu0 0.0
    %1921 = vmatpush1.xpose.msra.mxu0 0.0
    %1922 = vmatprep.subr.mxu0 0.0
    %1923 = vmatpush1.xpose.msra.mxu0 0.0
    %1924 = vmatprep.subr.mxu0 0.0
    %1925 = vmatpush1.xpose.msra.mxu0 0.0
    %1926 = vmatprep.subr.mxu0 0.0
    %1927 = vmatpush1.xpose.msra.mxu0 0.0
    %1928 = vmatprep.subr.mxu0 0.0
    %1929 = vmatpush1.xpose.msra.mxu0 0.0
    %1930 = vmatprep.subr.mxu0 0.0
    %1931 = vmatpush1.xpose.msra.mxu0 0.0
    %1932 = vmatprep.subr.mxu0 0.0
    %1933 = vmatpush1.xpose.msra.mxu0 0.0
    %1934 = vmatprep.subr.mxu0 0.0
    %1935 = vmatpush1.xpose.msra.mxu0 0.0
    %1936 = vmatprep.subr.mxu0 0.0
    %1937 = vmatpush1.xpose.msra.mxu0 0.0
    %1938 = vmatprep.subr.mxu0 0.0
    %1939 = vmatpush1.xpose.msra.mxu0 0.0
    %1940 = vmatprep.subr.mxu0 0.0
    %1941 = vmatpush1.xpose.msra.mxu0 0.0
    %v1942 = vand.u32 %v53, 4294901760
    %1943 = vmatprep.mubr.f32.mxu0 %v1942
    %v1944 = vand.u32 %v52, 4294901760
    %1945 = vmatmul.mubr.f32.gmra.mrb[0].mxu0 %v1944
    %v1946 = vpop.f32.mrb[0].mxu0
    %v1947 = vadd.f32 %v1873, %v1946
    %v1948 = vpop.f32.mrb[0].mxu0
    %1949 = vdwg.mxu0
    %v1950 = vmul.f32 %v46, %v46
    %v1951 = vmul.f32 %v47, %v47
    %v1952 = vmul.f32 %v48, %v48
    %v1953 = vmul.f32 %v49, %v49
    %v1954 = vmul.f32 %v50, %v50
    %v1955 = vmul.f32 %v51, %v51
    %v1956 = vmul.f32 %v52, %v52
    %v1957 = vmul.f32 %v53, %v53
    %v1958 = vadd.f32 %v1950, %v1951
    %v1959 = vadd.f32 %v1958, %v1952
    %v1960 = vadd.f32 %v1959, %v1953
    %v1961 = vadd.f32 %v1960, %v1954
    %v1962 = vadd.f32 %v1961, %v1955
    %v1963 = vadd.f32 %v1962, %v1956
    %v1964 = vadd.f32 %v1963, %v1957
    %1965 = vadd.xlane.f32.xlu0 %v1964
    %v1966 = vpop.xlane.xlu0 %1965
    %v1967 = vmul.f32 %v54, %v54
    %v1968 = vmul.f32 %v55, %v55
    %v1969 = vmul.f32 %v56, %v56
    %v1970 = vmul.f32 %v57, %v57
    %v1971 = vmul.f32 %v58, %v58
    %v1972 = vmul.f32 %v59, %v59
    %v1973 = vmul.f32 %v60, %v60
    %v1974 = vmul.f32 %v61, %v61
    %v1975 = vadd.f32 %v1967, %v1968
    %v1976 = vadd.f32 %v1975, %v1969
    %v1977 = vadd.f32 %v1976, %v1970
    %v1978 = vadd.f32 %v1977, %v1971
    %v1979 = vadd.f32 %v1978, %v1972
    %v1980 = vadd.f32 %v1979, %v1973
    %v1981 = vadd.f32 %v1980, %v1974
    %1982 = vadd.xlane.f32.xlu0 %v1981
    %v1983 = vpop.xlane.xlu0 %1982
    %v1985 = vlaneseq
    %v1986 = vand.u32 %v1985, 127
    %v1987 = vlaneseq
    %v1988 = vshrl.u32 %v1987, 7
    %v1989 = vsub.s32 %v1986, %v1988
    %v1990 = vrot.slane %v1983, %v1989
    %vm1991 = vcmask 1042434
    %v1992 = vsel %vm1991, %v1990, %v1990
    %vm1993 = vcmask 1043459
    %v1994 = vsel %vm1993, %v1990, %v1992
    %vm1995 = vcmask 1044484
    %v1996 = vsel %vm1995, %v1990, %v1994
    %vm1997 = vcmask 1045509
    %v1998 = vsel %vm1997, %v1990, %v1996
    %vm1999 = vcmask 1046534
    %v2000 = vsel %vm1999, %v1990, %v1998
    %vm2001 = vcmask 1047559
    %v2002 = vsel %vm2001, %v1990, %v2000
    %v2004 = vadd.f32 %v1966, %v2002
    %v2005 = vmul.f32 %v1947, 2.0
    %v2006 = vsub.f32 %v2004, %v2005
    %v2007 = vmax.f32 %v2006, 0.0
    %s2008 = smul.u32 0, 8
    %v2009 = vstv %s2008
    %v2010 = vadd.s32 %v1986, %v2009
    %vm2011 = vcmp.lt.s32.totalorder %v2010, 8
    %v2012 = vsel %vm2011, %v2007, inf
    %vm2013 = vcmask 64512
    %v2014 = vsel %vm2013, %v2012, inf
    %2015 = vmin.xlane.f32.xlu0 %v2014
    %v2016 = vpop.xlane.xlu0 %2015
    %vm2017 = vcmp.eq.f32.partialorder %v2012, %v2016
    %v2018 = vsel %vm2017, %v2010, 2147483647
    %v2019 = vsel %vm2013, %v2018, 2147483647
    %v2020 = vand.u32 %v2019, 65535
    %v2021 = vshra.s32 %v2019, 16
    %v2022 = vcvt.s32.f32 %v2020
    %v2023 = vcvt.s32.f32 %v2021
    %2024 = vmin.xlane.f32.xlu0 %v2023
    %v2025 = vpop.xlane.xlu0 %2024
    %vm2026 = vcmp.eq.f32.partialorder %v2023, %v2025
    %v2027 = vsel %vm2026, %v2022, inf
    %2028 = vmin.xlane.f32.xlu0 %v2027
    %v2029 = vpop.xlane.xlu0 %2028
    %v2030 = vcvt.f32.s32 %v2029
    %v2031 = vcvt.f32.s32 %v2025
    %v2032 = vshll.u32 %v2031, 16
    %v2033 = vadd.s32 %v2032, %v2030
    %v2034 = vld [vmem:[#allocation2] sm:$0x1]
    %v2035 = vld [vmem:[#allocation3] sm:$0x1]
    %v2037 = vlaneseq
    %v2038 = vshrl.u32 %v2037, 7
    %v2039 = vsub.s32 0, %v2038
    %v2040 = vrot.slane %v2034, %v2039
    %2042 = vbcast.lane.b32.xlu0 %v2040, 256
    %v2043 = vpop.permute.xlu0 %2042
    %vm2045 = vcmp.lt.f32.partialorder %v2016, %v2043
    %v2046 = vsel %vm2045, %v2016, %v2043
    %2048 = vset.pattern.permute.xlu0 0
    %2049 = vperm.xlu0 %2048, %v2046
    %v2050 = vpop.permute.xlu0 %2049
    %v2051 = vlaneseq
    %v2052 = vshrl.u32 %v2051, 7
    %v2053 = vsub.s32 %v1986, %v2052
    %v2054 = vrot.slane %v2050, %v2053
    %vm2056 = vcmask 57344
    %2057 = vst.msk [vmem:[#allocation2] sm:$0x1] %vm2056, %v2054
    %v2058 = vlaneseq
    %v2059 = vshrl.u32 %v2058, 7
    %v2060 = vsub.s32 0, %v2059
    %v2061 = vrot.slane %v2035, %v2060
    %2063 = vbcast.lane.b32.xlu0 %v2061, 256
    %v2064 = vpop.permute.xlu0 %2063
    %v2065 = vsel %vm2045, %v2033, %v2064
    %2066 = vset.pattern.permute.xlu0 0
    %2067 = vperm.xlu0 %2066, %v2065
    %v2068 = vpop.permute.xlu0 %2067
    %v2069 = vlaneseq
    %v2070 = vshrl.u32 %v2069, 7
    %v2071 = vsub.s32 %v1986, %v2070
    %v2072 = vrot.slane %v2068, %v2071
    %2073 = vst.msk [vmem:[#allocation3] sm:$0x1] %vm2056, %v2072
    // Predicated region
    $region22: #{tpu_custom_call.1} parent=1 // pred_check
      %p2074 = pneg %p39
    $region23: #{tpu_custom_call.1} parent=1 // pred_check_branch
      %2076 = sbr.rel (%p2074) target = $region25
    $region24: #{tpu_custom_call.1} parent=1 // pred_region
      %v2077 = vld [vmem:[#allocation2] sm:$0x1]
      %v2078 = vrsqrt.pop %v2077
      %v2079 = vmul.f32 %v2077, %v2078
      %vm2080 = vcmp.eq.f32.partialorder %v2077, inf
      %v2081 = vsel %vm2080, %v2077, %v2079
      %vm2082 = vcmp.eq.f32.partialorder %v2077, 0.0
      %v2083 = vand.u32 %v2077, 2147483648
      %v2084 = vsel %vm2082, %v2083, %v2081
      %2085 = vst.msk [vmem:[#allocation9] sm:$0x1] %vm2056, %v2084
      %v2086 = vld [vmem:[#allocation3] sm:$0x1]
      %2087 = vst.msk [vmem:[#allocation10] sm:$0x1] %vm2056, %v2086
    $region25: #{tpu_custom_call.1} parent=1 // pred_fallthru
      _
    // Predicated region
    $region26: #{tpu_custom_call.1} parent=1 // pred_check
      _
    $region27: #{tpu_custom_call.1} parent=1 // pred_check_branch
      %2089 = sbr.rel (0) target = $region29
    $region28: #{tpu_custom_call.1} parent=1 // pred_region
      %s2091 = ssub.s32 16, 16
      %2092 = vsyncadd [#allocation6], %s2091
      %s2094 = sshll.u32 [#allocation9], 4
      %s2095 = int_to_ptr.vmem [resolvable:$true] %s2094
      %2097 = dma.vmem_to_hbm [thread:$0]  %s2095, 16, %s2, [#allocation6]
    $region29: #{tpu_custom_call.1} parent=1 // pred_fallthru
      _
    // Predicated region
    $region30: #{tpu_custom_call.1} parent=1 // pred_check
      _
    $region31: #{tpu_custom_call.1} parent=1 // pred_check_branch
      %2099 = sbr.rel (0) target = $region33
    $region32: #{tpu_custom_call.1} parent=1 // pred_region
      %s2101 = ssub.s32 16, 16
      %2102 = vsyncadd [#allocation11], %s2101
      %s2104 = sshll.u32 [#allocation10], 4
      %s2105 = int_to_ptr.vmem [resolvable:$true] %s2104
      %2107 = dma.vmem_to_hbm [thread:$0]  %s2105, 16, %s3, [#allocation11]
    $region33: #{tpu_custom_call.1} parent=1 // pred_fallthru
      _
    // Predicated region
    $region34: #{tpu_custom_call.1} parent=1 // pred_check
      _
    $region35: #{tpu_custom_call.1} parent=1 // pred_check_branch
      %2109 = sbr.rel (0) target = $region37
    $region36: #{tpu_custom_call.1} parent=1 // pred_region
      %2110 = dma.done [#allocation6], 16
    $region37: #{tpu_custom_call.1} parent=1 // pred_fallthru
      _
    // Predicated region
    $region38: #{tpu_custom_call.1} parent=1 // pred_check
      _
    $region39: #{tpu_custom_call.1} parent=1 // pred_check_branch
      %2112 = sbr.rel (0) target = $region41
    $region40: #{tpu_custom_call.1} parent=1 // pred_region
      %2113 = dma.done [#allocation11], 16
    $region41: #{tpu_custom_call.1} parent=1 // pred_fallthru
      _
    %2114 = vsyncpa [#allocation5], 1
    %2115 = vsyncpa [#allocation8], 1
    %2116 = vsyncpa [#allocation6], 1
    %2117 = vsyncpa [#allocation11], 1

</llo_original>
